<compile_context>
chip_gen: v6e
topology: v6e:2x2x1
jax: 0.10.0
libtpu: 0.0.40
codegen_flags: <defaults>
</compile_context>

<pallas_src>
import math
from functools import partial

import jax
import jax.numpy as jnp
from jax import lax
from jax.experimental import pallas as pl
from jax.experimental.pallas import tpu as pltpu

GELU_C = math.sqrt(2.0 / math.pi)
NEG_INF = -1e30          # finite mask value (avoids inf-inf -> NaN)


def _gelu(x):
    return 0.5 * x * (1.0 + jnp.tanh(GELU_C * (x + 0.044715 * (x ** 3))))


def _layernorm(x, a2, b2, eps):
    # Module's custom LayerNorm: unbiased std (ddof=1), eps added to std.
    C = x.shape[-1]
    mean = jnp.mean(x, axis=-1, keepdims=True)
    diff = x - mean
    var = jnp.sum(diff * diff, axis=-1, keepdims=True) * (1.0 / (C - 1))
    std = jnp.sqrt(var)
    return a2 * diff * pl.reciprocal(std + eps, approx=True) + b2


def _vmem_limit_bytes():
    """Per-chip scoped-VMEM budget: <= 3/4 of capacity, capped at 100 MiB."""
    try:
        cap = pltpu.get_tpu_info().vmem_capacity_bytes
    except Exception:
        cap = 64 * 1024 * 1024
    return int(min(cap * 3 // 4, 100 * 1024 * 1024))


def _pick_tile(total, target, quantum):
    """Largest multiple of `quantum` <= target that divides `total`, else `total`."""
    start = (min(target, total) // quantum) * quantum
    for cand in range(start, 0, -quantum):
        if total % cand == 0:
            return cand
    return total


# ---------------------------------------------------------------------------
# Kernel 1: LN1 + fused QKV projection.
# Grid = (B, T // t1).  Outputs q, k, v as (B, n_head, T, head_dim) bf16.
# ---------------------------------------------------------------------------
def qkv_kernel(x_ref, ln1_a_ref, ln1_b_ref, wqkv_ref, bqkv_ref,
               q_ref, k_ref, v_ref, *, n_head, head_dim, eps):
    x = x_ref[...]                                              # (t1, C) f32
    C = x.shape[-1]
    h = _layernorm(x, ln1_a_ref[...], ln1_b_ref[...], eps).astype(jnp.bfloat16)
    # Fused QKV matmul (1/sqrt(hd) already folded into the Q columns/bias).
    qkv = jnp.dot(h, wqkv_ref[...],
                  preferred_element_type=jnp.float32) + bqkv_ref[...]
    for hi in range(n_head):
        lo = hi * head_dim
        q_ref[hi] = qkv[:, lo:lo + head_dim].astype(jnp.bfloat16)
        k_ref[hi] = qkv[:, C + lo:C + lo + head_dim].astype(jnp.bfloat16)
        v_ref[hi] = qkv[:, 2 * C + lo:2 * C + lo + head_dim].astype(jnp.bfloat16)


# ---------------------------------------------------------------------------
# Kernel 2: flash-style causal attention with deferred normalization.
# Grid = (B, n_head, T // tq, T // tkv), KV axis innermost ("arbitrary").
# Output (B, n_head, head_dim, T) bf16 — the torch transpose-contiguous layout.
# ---------------------------------------------------------------------------
def flash_attn_kernel(q_ref, k_ref, v_ref, o_ref, m_sc, l_sc, acc_sc,
                      *, tq, tkv):
    qi = pl.program_id(2)
    kv = pl.program_id(3)

    @pl.when(kv == 0)
    def _():
        m_sc[...] = jnp.full_like(m_sc, NEG_INF)
        l_sc[...] = jnp.zeros_like(l_sc)
        acc_sc[...] = jnp.zeros_like(acc_sc)

    # Skip KV tiles that lie entirely above the causal diagonal.
    @pl.when(kv * tkv <= qi * tq + (tq - 1))
    def _():
        q = q_ref[...]                                          # (tq, hd) bf16
        k = k_ref[...]                                          # (tkv, hd) bf16
        v = v_ref[...]                                          # (tkv, hd) bf16
        # Transposed scores (kv, q): keeps everything lane-dense along q so the
        # output lands directly in (hd, tq) with no in-kernel transpose.
        s = lax.dot_general(k, q, (((1,), (1,)), ((), ())),
                            preferred_element_type=jnp.float32)  # (tkv, tq)
        kv_pos = kv * tkv + lax.broadcasted_iota(jnp.int32, (tkv, tq), 0)
        q_pos = qi * tq + lax.broadcasted_iota(jnp.int32, (tkv, tq), 1)
        s = jnp.where(kv_pos <= q_pos, s, NEG_INF)

        m_prev = m_sc[...]                                      # (1, tq)
        m_new = jnp.maximum(m_prev, jnp.max(s, axis=0, keepdims=True))
        alpha = jnp.exp(m_prev - m_new)                         # (1, tq)
        p = jnp.exp(s - m_new)                                  # (tkv, tq)
        l_sc[...] = alpha * l_sc[...] + jnp.sum(p, axis=0, keepdims=True)
        # un-normalized accumulate: (hd, tq) += V^T @ P
        acc_sc[...] = alpha * acc_sc[...] + lax.dot_general(
            v, p.astype(jnp.bfloat16), (((0,), (0,)), ((), ())),
            preferred_element_type=jnp.float32)
        m_sc[...] = m_new

    @pl.when(kv == pl.num_programs(3) - 1)
    def _():
        inv_l = pl.reciprocal(l_sc[...], approx=True)           # (1, tq)
        o_ref[...] = (acc_sc[...] * inv_l).astype(o_ref.dtype)  # (hd, tq)


# ---------------------------------------------------------------------------
# Kernel 3: output projection + residual + LN2 + FFN (K-tiled over d_inter)
#           + residual.  Grid = (B, T // tq2, d_inter // tk_ff).
# ---------------------------------------------------------------------------
def ffn_kernel(x_ref, att_ref, wp_ref, bp_ref, ln2_a_ref, ln2_b_ref,
               w1_ref, b1_ref, w2_ref, b2_ref, o_ref,
               x1_sc, h_sc, acc_sc, *, eps):
    kk = pl.program_id(2)

    @pl.when(kk == 0)
    def _():
        x = x_ref[...]                                          # (tq2, C) f32
        att = att_ref[...]                                      # (tq2, C) bf16
        proj = jnp.dot(att, wp_ref[...],
                       preferred_element_type=jnp.float32) + bp_ref[...]
        # proj_drop: eval mode (identity)
        x1 = x + proj                                           # residual 1
        x1_sc[...] = x1
        h_sc[...] = _layernorm(x1, ln2_a_ref[...], ln2_b_ref[...],
                               eps).astype(jnp.bfloat16)
        acc_sc[...] = jnp.zeros_like(acc_sc)

    # FFN chunk over d_inter: gelu(h @ W1[:, chunk] + b1[chunk]) @ W2[chunk, :]
    f = _gelu(jnp.dot(h_sc[...], w1_ref[...],
                      preferred_element_type=jnp.float32) + b1_ref[...])
    acc_sc[...] += jnp.dot(f.astype(jnp.bfloat16), w2_ref[...],
                           preferred_element_type=jnp.float32)

    @pl.when(kk == pl.num_programs(2) - 1)
    def _():
        # ffn dropout: eval mode (identity)
        o_ref[...] = x1_sc[...] + acc_sc[...] + b2_ref[...]     # residual 2


# ---------------------------------------------------------------------------
# Wrapper
# ---------------------------------------------------------------------------
def block_forward(x, params, *, n_head, eps=1e-6):
    B, T, C = x.shape
    assert C % n_head == 0
    head_dim = C // n_head
    d_inter = params["w_ffn1"].shape[1]
    vmem_limit = _vmem_limit_bytes()

    # Weight folds: scale Q columns of the fused QKV weight/bias by 1/sqrt(hd).
    scale = 1.0 / math.sqrt(head_dim)
    wqkv = jnp.concatenate(
        [params["w_q"] * scale, params["w_k"], params["w_v"]],
        axis=1).astype(jnp.bfloat16)
    bqkv = jnp.concatenate(
        [params["b_q"] * scale, params["b_k"], params["b_v"]], axis=1)
    w_proj = params["w_proj"].astype(jnp.bfloat16)
    w_ffn1 = params["w_ffn1"].astype(jnp.bfloat16)
    w_ffn2 = params["w_ffn2"].astype(jnp.bfloat16)

    # Tile choices (sublane/lane aware, loosely budget-aware).
    t1 = _pick_tile(T, 256, 8)                      # QKV kernel seq tile
    tq_a = _pick_tile(T, 256, 128)                  # attention q tile (lane-dense out)
    tkv_a = _pick_tile(T, 256, 128)                 # attention kv tile
    tq2_target = int(min(256, max(8, vmem_limit // (40 * C))))
    tq2 = _pick_tile(T, (tq2_target // 8) * 8, 8)   # FFN kernel seq tile
    tk_target = int(min(2048, max(128, vmem_limit // (3 * (8 * C + 4 * tq2)))))
    tk_ff = _pick_tile(d_inter, (tk_target // 128) * 128, 128)  # d_inter chunk

    # ---- kernel 1: LN1 + fused QKV projection ------------------------------
    qkv_shape = jax.ShapeDtypeStruct((B, n_head, T, head_dim), jnp.bfloat16)
    q_hbm, k_hbm, v_hbm = pl.pallas_call(
        partial(qkv_kernel, n_head=n_head, head_dim=head_dim, eps=eps),
        out_shape=[qkv_shape, qkv_shape, qkv_shape],
        grid=(B, T // t1),
        in_specs=[
            pl.BlockSpec((None, t1, C), lambda b, t: (b, t, 0)),    # x
            pl.BlockSpec((1, C), lambda b, t: (0, 0)),              # ln1 a
            pl.BlockSpec((1, C), lambda b, t: (0, 0)),              # ln1 b
            pl.BlockSpec((C, 3 * C), lambda b, t: (0, 0)),          # Wqkv
            pl.BlockSpec((1, 3 * C), lambda b, t: (0, 0)),          # bqkv
        ],
        out_specs=[
            pl.BlockSpec((None, n_head, t1, head_dim), lambda b, t: (b, 0, t, 0)),
            pl.BlockSpec((None, n_head, t1, head_dim), lambda b, t: (b, 0, t, 0)),
            pl.BlockSpec((None, n_head, t1, head_dim), lambda b, t: (b, 0, t, 0)),
        ],
        compiler_params=pltpu.CompilerParams(
            dimension_semantics=("parallel", "parallel"),
            vmem_limit_bytes=vmem_limit),
    )(x, params["ln1_a"], params["ln1_b"], wqkv, bqkv)

    # ---- kernel 2: flash causal attention ----------------------------------
    att_hbm = pl.pallas_call(
        partial(flash_attn_kernel, tq=tq_a, tkv=tkv_a),
        out_shape=jax.ShapeDtypeStruct((B, n_head, head_dim, T), jnp.bfloat16),
        grid=(B, n_head, T // tq_a, T // tkv_a),
        in_specs=[
            pl.BlockSpec((None, None, tq_a, head_dim),
                         lambda b, h, qi, kv: (b, h, qi, 0)),       # q
            pl.BlockSpec((None, None, tkv_a, head_dim),
                         lambda b, h, qi, kv: (b, h, kv, 0)),       # k
            pl.BlockSpec((None, None, tkv_a, head_dim),
                         lambda b, h, qi, kv: (b, h, kv, 0)),       # v
        ],
        out_specs=pl.BlockSpec((None, None, head_dim, tq_a),
                               lambda b, h, qi, kv: (b, h, 0, qi)),
        scratch_shapes=[
            pltpu.VMEM((1, tq_a), jnp.float32),          # m (running max)
            pltpu.VMEM((1, tq_a), jnp.float32),          # l (running denom)
            pltpu.VMEM((head_dim, tq_a), jnp.float32),   # acc
        ],
        compiler_params=pltpu.CompilerParams(
            dimension_semantics=("parallel", "parallel", "parallel", "arbitrary"),
            vmem_limit_bytes=vmem_limit),
    )(q_hbm, k_hbm, v_hbm)

    # torch's `out.transpose(-2,-1).contiguous().view(B,T,C)`: the kernel already
    # wrote the transposed-contiguous layout, so this reshape is a free bitcast.
    att_view = att_hbm.reshape(B, T, C)

    # ---- kernel 3: proj + residual + LN2 + FFN (K-tiled) + residual --------
    out = pl.pallas_call(
        partial(ffn_kernel, eps=eps),
        out_shape=jax.ShapeDtypeStruct((B, T, C), jnp.float32),
        grid=(B, T // tq2, d_inter // tk_ff),
        in_specs=[
            pl.BlockSpec((None, tq2, C), lambda b, t, kk: (b, t, 0)),   # x
            pl.BlockSpec((None, tq2, C), lambda b, t, kk: (b, t, 0)),   # att view
            pl.BlockSpec((C, C), lambda b, t, kk: (0, 0)),              # W_proj
            pl.BlockSpec((1, C), lambda b, t, kk: (0, 0)),              # b_proj
            pl.BlockSpec((1, C), lambda b, t, kk: (0, 0)),              # ln2 a
            pl.BlockSpec((1, C), lambda b, t, kk: (0, 0)),              # ln2 b
            pl.BlockSpec((C, tk_ff), lambda b, t, kk: (0, kk)),         # W_ffn1 chunk
            pl.BlockSpec((1, tk_ff), lambda b, t, kk: (0, kk)),         # b_ffn1 chunk
            pl.BlockSpec((tk_ff, C), lambda b, t, kk: (kk, 0)),         # W_ffn2 chunk
            pl.BlockSpec((1, C), lambda b, t, kk: (0, 0)),              # b_ffn2
        ],
        out_specs=pl.BlockSpec((None, tq2, C), lambda b, t, kk: (b, t, 0)),
        scratch_shapes=[
            pltpu.VMEM((tq2, C), jnp.float32),    # x1 (residual-1 output)
            pltpu.VMEM((tq2, C), jnp.bfloat16),   # LN2(x1), bf16 matmul operand
            pltpu.VMEM((tq2, C), jnp.float32),    # FFN accumulator
        ],
        compiler_params=pltpu.CompilerParams(
            dimension_semantics=("parallel", "parallel", "arbitrary"),
            vmem_limit_bytes=vmem_limit),
    )(x, att_view, w_proj, params["b_proj"], params["ln2_a"], params["ln2_b"],
      w_ffn1, params["b_ffn1"], w_ffn2, params["b_ffn2"])
    return out


# ------------------------------ pure-JAX reference -------------------------
def block_reference(x, params, *, n_head, eps=1e-6):
    B, T, C = x.shape
    hd = C // n_head

    def ln(z, a, b):
        mean = z.mean(-1, keepdims=True)
        var = ((z - mean) ** 2).sum(-1, keepdims=True) / (C - 1)
        return a * (z - mean) / (jnp.sqrt(var) + eps) + b

    h = ln(x, params["ln1_a"], params["ln1_b"])
    q = (h @ params["w_q"] + params["b_q"]).reshape(B, T, n_head, hd).transpose(0, 2, 1, 3)
    k = (h @ params["w_k"] + params["b_k"]).reshape(B, T, n_head, hd).transpose(0, 2, 1, 3)
    v = (h @ params["w_v"] + params["b_v"]).reshape(B, T, n_head, hd).transpose(0, 2, 1, 3)
    s = (q @ jnp.swapaxes(k, -2, -1)) / math.sqrt(hd)
    mask = jnp.tril(jnp.ones((T, T)))
    s = jnp.where(mask == 0, -jnp.inf, s)
    p = jax.nn.softmax(s, axis=-1)
    o = p @ v
    o = jnp.swapaxes(o, -2, -1).reshape(B, T, C)   # matches the torch .transpose().view()
    o = o @ params["w_proj"] + params["b_proj"]
    x1 = x + o
    h2 = ln(x1, params["ln2_a"], params["ln2_b"])
    f = _gelu(h2 @ params["w_ffn1"] + params["b_ffn1"])
    f = f @ params["w_ffn2"] + params["b_ffn2"]
    return x1 + f


if __name__ == "__main__":
    B, T, C, n_head, d_inter = 2, 8, 32, 4, 64
    key = jax.random.PRNGKey(0)
    ks = jax.random.split(key, 12)

    def w(k, shape, scale=0.05):
        return scale * jax.random.normal(k, shape, dtype=jnp.float32)

    params = {
        "ln1_a": jnp.ones((1, C), jnp.float32),
        "ln1_b": jnp.ones((1, C), jnp.float32),
        "ln2_a": jnp.ones((1, C), jnp.float32),
        "ln2_b": jnp.ones((1, C), jnp.float32),
        "w_q": w(ks[0], (C, C)), "b_q": w(ks[1], (1, C)),
        "w_k": w(ks[2], (C, C)), "b_k": w(ks[3], (1, C)),
        "w_v": w(ks[4], (C, C)), "b_v": w(ks[5], (1, C)),
        "w_proj": w(ks[6], (C, C)), "b_proj": w(ks[7], (1, C)),
        "w_ffn1": w(ks[8], (C, d_inter)), "b_ffn1": w(ks[9], (1, d_inter)),
        "w_ffn2": w(ks[10], (d_inter, C)), "b_ffn2": w(ks[11], (1, C)),
    }
    x = jax.random.normal(key, (B, T, C), dtype=jnp.float32)

    fwd = jax.jit(partial(block_forward, n_head=n_head))
    out = jax.block_until_ready(fwd(x, params))
    ref = block_reference(x, params, n_head=n_head)

    assert out.shape == (B, T, C)
    max_err = float(jnp.max(jnp.abs(out - ref)))
    assert jnp.allclose(out, ref, atol=1e-2, rtol=1e-2), \
        f"mismatch vs. JAX reference (max abs err {max_err})"
    print("KERNEL_OK")
</pallas_src>

<mosaic_0001>
module attributes {stable_mosaic.version = 11 : i64} {
  func.func @qkv_kernel(%arg0: i32, %arg1: i32, %arg2: memref<1x8x32xf32, #tpu.memory_space<vmem>>, %arg3: memref<1x32xf32, #tpu.memory_space<vmem>>, %arg4: memref<1x32xf32, #tpu.memory_space<vmem>>, %arg5: memref<32x96xbf16, #tpu.memory_space<vmem>>, %arg6: memref<1x96xf32, #tpu.memory_space<vmem>>, %arg7: memref<1x4x8x8xbf16, #tpu.memory_space<vmem>>, %arg8: memref<1x4x8x8xbf16, #tpu.memory_space<vmem>>, %arg9: memref<1x4x8x8xbf16, #tpu.memory_space<vmem>>) attributes {dimension_semantics = [#tpu.dimension_semantics<parallel>, #tpu.dimension_semantics<parallel>], iteration_bounds = array<i64: 2, 1>, scalar_prefetch = 0 : i64, scratch_operands = 0 : i64, tpu.core_type = #tpu.core_type<tc>, window_params = [{transform_indices = @transform_0, window_bounds = array<i64: 1, 8, 32>}, {pipeline_mode = #tpu.pipeline_mode<synchronous>, transform_indices = @transform_1, window_bounds = array<i64: 1, 32>}, {pipeline_mode = #tpu.pipeline_mode<synchronous>, transform_indices = @transform_2, window_bounds = array<i64: 1, 32>}, {pipeline_mode = #tpu.pipeline_mode<synchronous>, transform_indices = @transform_3, window_bounds = array<i64: 32, 96>}, {pipeline_mode = #tpu.pipeline_mode<synchronous>, transform_indices = @transform_4, window_bounds = array<i64: 1, 96>}, {transform_indices = @transform_5, window_bounds = array<i64: 1, 4, 8, 8>}, {transform_indices = @transform_6, window_bounds = array<i64: 1, 4, 8, 8>}, {transform_indices = @transform_7, window_bounds = array<i64: 1, 4, 8, 8>}]} {
    %c0 = arith.constant 0 : index
    %c0_0 = arith.constant 0 : index
    %c0_1 = arith.constant 0 : index
    %0 = vector.load %arg2[%c0, %c0_0, %c0_1] : memref<1x8x32xf32, #tpu.memory_space<vmem>>, vector<1x8x32xf32>
    %1 = vector.shape_cast %0 : vector<1x8x32xf32> to vector<8x32xf32>
    %c0_2 = arith.constant 0 : index
    %c0_3 = arith.constant 0 : index
    %2 = vector.load %arg3[%c0_2, %c0_3] : memref<1x32xf32, #tpu.memory_space<vmem>>, vector<1x32xf32>
    %c0_4 = arith.constant 0 : index
    %c0_5 = arith.constant 0 : index
    %3 = vector.load %arg4[%c0_4, %c0_5] : memref<1x32xf32, #tpu.memory_space<vmem>>, vector<1x32xf32>
    %cst = arith.constant dense<0.000000e+00> : vector<8xf32>
    %4 = vector.multi_reduction <add>, %1, %cst [1] : vector<8x32xf32> to vector<8xf32>
    %5 = vector.shape_cast %4 : vector<8xf32> to vector<8x1xf32>
    %cst_6 = arith.constant 3.200000e+01 : f32
    %6 = vector.broadcast %cst_6 : f32 to vector<8x1xf32>
    %7 = arith.divf %5, %6 : vector<8x1xf32>
    %8 = vector.broadcast %7 : vector<8x1xf32> to vector<8x32xf32>
    %9 = arith.subf %1, %8 : vector<8x32xf32>
    %10 = arith.mulf %9, %9 : vector<8x32xf32>
    %cst_7 = arith.constant dense<0.000000e+00> : vector<8xf32>
    %11 = vector.multi_reduction <add>, %10, %cst_7 [1] : vector<8x32xf32> to vector<8xf32>
    %12 = vector.shape_cast %11 : vector<8xf32> to vector<8x1xf32>
    %cst_8 = arith.constant 0.0322580636 : f32
    %13 = vector.broadcast %cst_8 : f32 to vector<8x1xf32>
    %14 = arith.mulf %12, %13 : vector<8x1xf32>
    %15 = math.sqrt %14 : vector<8x1xf32>
    %16 = vector.broadcast %2 : vector<1x32xf32> to vector<8x32xf32>
    %17 = arith.mulf %16, %9 : vector<8x32xf32>
    %cst_9 = arith.constant 9.99999997E-7 : f32
    %18 = vector.broadcast %cst_9 : f32 to vector<8x1xf32>
    %19 = arith.addf %15, %18 : vector<8x1xf32>
    %20 = tpu.reciprocal %19 {approx = true} : vector<8x1xf32> -> vector<8x1xf32>
    %21 = vector.broadcast %20 : vector<8x1xf32> to vector<8x32xf32>
    %22 = arith.mulf %17, %21 : vector<8x32xf32>
    %23 = vector.broadcast %3 : vector<1x32xf32> to vector<8x32xf32>
    %24 = arith.addf %22, %23 : vector<8x32xf32>
    %25 = arith.truncf %24 : vector<8x32xf32> to vector<8x32xbf16>
    %c0_10 = arith.constant 0 : index
    %c0_11 = arith.constant 0 : index
    %26 = vector.load %arg5[%c0_10, %c0_11] : memref<32x96xbf16, #tpu.memory_space<vmem>>, vector<32x96xbf16>
    %cst_12 = arith.constant dense<0.000000e+00> : vector<8x96xf32>
    %27 = tpu.matmul %25, %26, %cst_12 {dimension_numbers = #tpu.dot_dimension_numbers<[1], [0], [0], [1], [0, 0, 1, 1], [], []>} : vector<8x32xbf16>, vector<32x96xbf16>, vector<8x96xf32> -> vector<8x96xf32>
    %c0_13 = arith.constant 0 : index
    %c0_14 = arith.constant 0 : index
    %28 = vector.load %arg6[%c0_13, %c0_14] : memref<1x96xf32, #tpu.memory_space<vmem>>, vector<1x96xf32>
    %29 = vector.broadcast %28 : vector<1x96xf32> to vector<8x96xf32>
    %30 = arith.addf %27, %29 : vector<8x96xf32>
    %31 = vector.extract_strided_slice %30 {offsets = [0, 0], sizes = [8, 8], strides = [1, 1]} : vector<8x96xf32> to vector<8x8xf32>
    %32 = arith.truncf %31 : vector<8x8xf32> to vector<8x8xbf16>
    %c0_15 = arith.constant 0 : index
    %c0_16 = arith.constant 0 : index
    %c0_17 = arith.constant 0 : index
    %c0_18 = arith.constant 0 : index
    %33 = vector.load %arg7[%c0_15, %c0_16, %c0_17, %c0_18] : memref<1x4x8x8xbf16, #tpu.memory_space<vmem>>, vector<1x1x8x8xbf16>
    %34 = vector.shape_cast %33 : vector<1x1x8x8xbf16> to vector<8x8xbf16>
    %35 = vector.shape_cast %32 : vector<8x8xbf16> to vector<1x1x8x8xbf16>
    tpu.vector_store %arg7[%c0_15, %c0_16, %c0_17, %c0_18], %35 {strides = array<i32>} : memref<1x4x8x8xbf16, #tpu.memory_space<vmem>>, vector<1x1x8x8xbf16>,
    %36 = vector.extract_strided_slice %30 {offsets = [0, 32], sizes = [8, 8], strides = [1, 1]} : vector<8x96xf32> to vector<8x8xf32>
    %37 = arith.truncf %36 : vector<8x8xf32> to vector<8x8xbf16>
    %c0_19 = arith.constant 0 : index
    %c0_20 = arith.constant 0 : index
    %c0_21 = arith.constant 0 : index
    %c0_22 = arith.constant 0 : index
    %38 = vector.load %arg8[%c0_19, %c0_20, %c0_21, %c0_22] : memref<1x4x8x8xbf16, #tpu.memory_space<vmem>>, vector<1x1x8x8xbf16>
    %39 = vector.shape_cast %38 : vector<1x1x8x8xbf16> to vector<8x8xbf16>
    %40 = vector.shape_cast %37 : vector<8x8xbf16> to vector<1x1x8x8xbf16>
    tpu.vector_store %arg8[%c0_19, %c0_20, %c0_21, %c0_22], %40 {strides = array<i32>} : memref<1x4x8x8xbf16, #tpu.memory_space<vmem>>, vector<1x1x8x8xbf16>,
    %41 = vector.extract_strided_slice %30 {offsets = [0, 64], sizes = [8, 8], strides = [1, 1]} : vector<8x96xf32> to vector<8x8xf32>
    %42 = arith.truncf %41 : vector<8x8xf32> to vector<8x8xbf16>
    %c0_23 = arith.constant 0 : index
    %c0_24 = arith.constant 0 : index
    %c0_25 = arith.constant 0 : index
    %c0_26 = arith.constant 0 : index
    %43 = vector.load %arg9[%c0_23, %c0_24, %c0_25, %c0_26] : memref<1x4x8x8xbf16, #tpu.memory_space<vmem>>, vector<1x1x8x8xbf16>
    %44 = vector.shape_cast %43 : vector<1x1x8x8xbf16> to vector<8x8xbf16>
    %45 = vector.shape_cast %42 : vector<8x8xbf16> to vector<1x1x8x8xbf16>
    tpu.vector_store %arg9[%c0_23, %c0_24, %c0_25, %c0_26], %45 {strides = array<i32>} : memref<1x4x8x8xbf16, #tpu.memory_space<vmem>>, vector<1x1x8x8xbf16>,
    %46 = vector.extract_strided_slice %30 {offsets = [0, 8], sizes = [8, 8], strides = [1, 1]} : vector<8x96xf32> to vector<8x8xf32>
    %47 = arith.truncf %46 : vector<8x8xf32> to vector<8x8xbf16>
    %c0_27 = arith.constant 0 : index
    %c1 = arith.constant 1 : index
    %c0_28 = arith.constant 0 : index
    %c0_29 = arith.constant 0 : index
    %48 = vector.load %arg7[%c0_27, %c1, %c0_28, %c0_29] : memref<1x4x8x8xbf16, #tpu.memory_space<vmem>>, vector<1x1x8x8xbf16>
    %49 = vector.shape_cast %48 : vector<1x1x8x8xbf16> to vector<8x8xbf16>
    %50 = vector.shape_cast %47 : vector<8x8xbf16> to vector<1x1x8x8xbf16>
    tpu.vector_store %arg7[%c0_27, %c1, %c0_28, %c0_29], %50 {strides = array<i32>} : memref<1x4x8x8xbf16, #tpu.memory_space<vmem>>, vector<1x1x8x8xbf16>,
    %51 = vector.extract_strided_slice %30 {offsets = [0, 40], sizes = [8, 8], strides = [1, 1]} : vector<8x96xf32> to vector<8x8xf32>
    %52 = arith.truncf %51 : vector<8x8xf32> to vector<8x8xbf16>
    %c0_30 = arith.constant 0 : index
    %c1_31 = arith.constant 1 : index
    %c0_32 = arith.constant 0 : index
    %c0_33 = arith.constant 0 : index
    %53 = vector.load %arg8[%c0_30, %c1_31, %c0_32, %c0_33] : memref<1x4x8x8xbf16, #tpu.memory_space<vmem>>, vector<1x1x8x8xbf16>
    %54 = vector.shape_cast %53 : vector<1x1x8x8xbf16> to vector<8x8xbf16>
    %55 = vector.shape_cast %52 : vector<8x8xbf16> to vector<1x1x8x8xbf16>
    tpu.vector_store %arg8[%c0_30, %c1_31, %c0_32, %c0_33], %55 {strides = array<i32>} : memref<1x4x8x8xbf16, #tpu.memory_space<vmem>>, vector<1x1x8x8xbf16>,
    %56 = vector.extract_strided_slice %30 {offsets = [0, 72], sizes = [8, 8], strides = [1, 1]} : vector<8x96xf32> to vector<8x8xf32>
    %57 = arith.truncf %56 : vector<8x8xf32> to vector<8x8xbf16>
    %c0_34 = arith.constant 0 : index
    %c1_35 = arith.constant 1 : index
    %c0_36 = arith.constant 0 : index
    %c0_37 = arith.constant 0 : index
    %58 = vector.load %arg9[%c0_34, %c1_35, %c0_36, %c0_37] : memref<1x4x8x8xbf16, #tpu.memory_space<vmem>>, vector<1x1x8x8xbf16>
    %59 = vector.shape_cast %58 : vector<1x1x8x8xbf16> to vector<8x8xbf16>
    %60 = vector.shape_cast %57 : vector<8x8xbf16> to vector<1x1x8x8xbf16>
    tpu.vector_store %arg9[%c0_34, %c1_35, %c0_36, %c0_37], %60 {strides = array<i32>} : memref<1x4x8x8xbf16, #tpu.memory_space<vmem>>, vector<1x1x8x8xbf16>,
    %61 = vector.extract_strided_slice %30 {offsets = [0, 16], sizes = [8, 8], strides = [1, 1]} : vector<8x96xf32> to vector<8x8xf32>
    %62 = arith.truncf %61 : vector<8x8xf32> to vector<8x8xbf16>
    %c0_38 = arith.constant 0 : index
    %c2 = arith.constant 2 : index
    %c0_39 = arith.constant 0 : index
    %c0_40 = arith.constant 0 : index
    %63 = vector.load %arg7[%c0_38, %c2, %c0_39, %c0_40] : memref<1x4x8x8xbf16, #tpu.memory_space<vmem>>, vector<1x1x8x8xbf16>
    %64 = vector.shape_cast %63 : vector<1x1x8x8xbf16> to vector<8x8xbf16>
    %65 = vector.shape_cast %62 : vector<8x8xbf16> to vector<1x1x8x8xbf16>
    tpu.vector_store %arg7[%c0_38, %c2, %c0_39, %c0_40], %65 {strides = array<i32>} : memref<1x4x8x8xbf16, #tpu.memory_space<vmem>>, vector<1x1x8x8xbf16>,
    %66 = vector.extract_strided_slice %30 {offsets = [0, 48], sizes = [8, 8], strides = [1, 1]} : vector<8x96xf32> to vector<8x8xf32>
    %67 = arith.truncf %66 : vector<8x8xf32> to vector<8x8xbf16>
    %c0_41 = arith.constant 0 : index
    %c2_42 = arith.constant 2 : index
    %c0_43 = arith.constant 0 : index
    %c0_44 = arith.constant 0 : index
    %68 = vector.load %arg8[%c0_41, %c2_42, %c0_43, %c0_44] : memref<1x4x8x8xbf16, #tpu.memory_space<vmem>>, vector<1x1x8x8xbf16>
    %69 = vector.shape_cast %68 : vector<1x1x8x8xbf16> to vector<8x8xbf16>
    %70 = vector.shape_cast %67 : vector<8x8xbf16> to vector<1x1x8x8xbf16>
    tpu.vector_store %arg8[%c0_41, %c2_42, %c0_43, %c0_44], %70 {strides = array<i32>} : memref<1x4x8x8xbf16, #tpu.memory_space<vmem>>, vector<1x1x8x8xbf16>,
    %71 = vector.extract_strided_slice %30 {offsets = [0, 80], sizes = [8, 8], strides = [1, 1]} : vector<8x96xf32> to vector<8x8xf32>
    %72 = arith.truncf %71 : vector<8x8xf32> to vector<8x8xbf16>
    %c0_45 = arith.constant 0 : index
    %c2_46 = arith.constant 2 : index
    %c0_47 = arith.constant 0 : index
    %c0_48 = arith.constant 0 : index
    %73 = vector.load %arg9[%c0_45, %c2_46, %c0_47, %c0_48] : memref<1x4x8x8xbf16, #tpu.memory_space<vmem>>, vector<1x1x8x8xbf16>
    %74 = vector.shape_cast %73 : vector<1x1x8x8xbf16> to vector<8x8xbf16>
    %75 = vector.shape_cast %72 : vector<8x8xbf16> to vector<1x1x8x8xbf16>
    tpu.vector_store %arg9[%c0_45, %c2_46, %c0_47, %c0_48], %75 {strides = array<i32>} : memref<1x4x8x8xbf16, #tpu.memory_space<vmem>>, vector<1x1x8x8xbf16>,
    %76 = vector.extract_strided_slice %30 {offsets = [0, 24], sizes = [8, 8], strides = [1, 1]} : vector<8x96xf32> to vector<8x8xf32>
    %77 = arith.truncf %76 : vector<8x8xf32> to vector<8x8xbf16>
    %c0_49 = arith.constant 0 : index
    %c3 = arith.constant 3 : index
    %c0_50 = arith.constant 0 : index
    %c0_51 = arith.constant 0 : index
    %78 = vector.load %arg7[%c0_49, %c3, %c0_50, %c0_51] : memref<1x4x8x8xbf16, #tpu.memory_space<vmem>>, vector<1x1x8x8xbf16>
    %79 = vector.shape_cast %78 : vector<1x1x8x8xbf16> to vector<8x8xbf16>
    %80 = vector.shape_cast %77 : vector<8x8xbf16> to vector<1x1x8x8xbf16>
    tpu.vector_store %arg7[%c0_49, %c3, %c0_50, %c0_51], %80 {strides = array<i32>} : memref<1x4x8x8xbf16, #tpu.memory_space<vmem>>, vector<1x1x8x8xbf16>,
    %81 = vector.extract_strided_slice %30 {offsets = [0, 56], sizes = [8, 8], strides = [1, 1]} : vector<8x96xf32> to vector<8x8xf32>
    %82 = arith.truncf %81 : vector<8x8xf32> to vector<8x8xbf16>
    %c0_52 = arith.constant 0 : index
    %c3_53 = arith.constant 3 : index
    %c0_54 = arith.constant 0 : index
    %c0_55 = arith.constant 0 : index
    %83 = vector.load %arg8[%c0_52, %c3_53, %c0_54, %c0_55] : memref<1x4x8x8xbf16, #tpu.memory_space<vmem>>, vector<1x1x8x8xbf16>
    %84 = vector.shape_cast %83 : vector<1x1x8x8xbf16> to vector<8x8xbf16>
    %85 = vector.shape_cast %82 : vector<8x8xbf16> to vector<1x1x8x8xbf16>
    tpu.vector_store %arg8[%c0_52, %c3_53, %c0_54, %c0_55], %85 {strides = array<i32>} : memref<1x4x8x8xbf16, #tpu.memory_space<vmem>>, vector<1x1x8x8xbf16>,
    %86 = vector.extract_strided_slice %30 {offsets = [0, 88], sizes = [8, 8], strides = [1, 1]} : vector<8x96xf32> to vector<8x8xf32>
    %87 = arith.truncf %86 : vector<8x8xf32> to vector<8x8xbf16>
    %c0_56 = arith.constant 0 : index
    %c3_57 = arith.constant 3 : index
    %c0_58 = arith.constant 0 : index
    %c0_59 = arith.constant 0 : index
    %88 = vector.load %arg9[%c0_56, %c3_57, %c0_58, %c0_59] : memref<1x4x8x8xbf16, #tpu.memory_space<vmem>>, vector<1x1x8x8xbf16>
    %89 = vector.shape_cast %88 : vector<1x1x8x8xbf16> to vector<8x8xbf16>
    %90 = vector.shape_cast %87 : vector<8x8xbf16> to vector<1x1x8x8xbf16>
    tpu.vector_store %arg9[%c0_56, %c3_57, %c0_58, %c0_59], %90 {strides = array<i32>} : memref<1x4x8x8xbf16, #tpu.memory_space<vmem>>, vector<1x1x8x8xbf16>,
    return
  }
  func.func @transform_0(%arg0: i32, %arg1: i32) -> (i32, i32, i32) {
    %c0_i32 = arith.constant 0 : i32
    %c0_i32_0 = arith.constant 0 : i32
    return %arg0, %arg1, %c0_i32 : i32, i32, i32
  }
  func.func @transform_1(%arg0: i32, %arg1: i32) -> (i32, i32) {
    %c0_i32 = arith.constant 0 : i32
    %c0_i32_0 = arith.constant 0 : i32
    %c0_i32_1 = arith.constant 0 : i32
    return %c0_i32, %c0_i32_0 : i32, i32
  }
  func.func @transform_2(%arg0: i32, %arg1: i32) -> (i32, i32) {
    %c0_i32 = arith.constant 0 : i32
    %c0_i32_0 = arith.constant 0 : i32
    %c0_i32_1 = arith.constant 0 : i32
    return %c0_i32, %c0_i32_0 : i32, i32
  }
  func.func @transform_3(%arg0: i32, %arg1: i32) -> (i32, i32) {
    %c0_i32 = arith.constant 0 : i32
    %c0_i32_0 = arith.constant 0 : i32
    %c0_i32_1 = arith.constant 0 : i32
    return %c0_i32, %c0_i32_0 : i32, i32
  }
  func.func @transform_4(%arg0: i32, %arg1: i32) -> (i32, i32) {
    %c0_i32 = arith.constant 0 : i32
    %c0_i32_0 = arith.constant 0 : i32
    %c0_i32_1 = arith.constant 0 : i32
    return %c0_i32, %c0_i32_0 : i32, i32
  }
  func.func @transform_5(%arg0: i32, %arg1: i32) -> (i32, i32, i32, i32) {
    %c0_i32 = arith.constant 0 : i32
    %c0_i32_0 = arith.constant 0 : i32
    %c0_i32_1 = arith.constant 0 : i32
    return %arg0, %c0_i32, %arg1, %c0_i32_0 : i32, i32, i32, i32
  }
  func.func @transform_6(%arg0: i32, %arg1: i32) -> (i32, i32, i32, i32) {
    %c0_i32 = arith.constant 0 : i32
    %c0_i32_0 = arith.constant 0 : i32
    %c0_i32_1 = arith.constant 0 : i32
    return %arg0, %c0_i32, %arg1, %c0_i32_0 : i32, i32, i32, i32
  }
  func.func @transform_7(%arg0: i32, %arg1: i32) -> (i32, i32, i32, i32) {
    %c0_i32 = arith.constant 0 : i32
    %c0_i32_0 = arith.constant 0 : i32
    %c0_i32_1 = arith.constant 0 : i32
    return %arg0, %c0_i32, %arg1, %c0_i32_0 : i32, i32, i32, i32
  }
}

module attributes {stable_mosaic.version = 11 : i64} {
  func.func @flash_attn_kernel(%arg0: i32, %arg1: i32, %arg2: i32, %arg3: i32, %arg4: memref<1x1x8x8xbf16, #tpu.memory_space<vmem>>, %arg5: memref<1x1x8x8xbf16, #tpu.memory_space<vmem>>, %arg6: memref<1x1x8x8xbf16, #tpu.memory_space<vmem>>, %arg7: memref<1x1x8x8xbf16, #tpu.memory_space<vmem>>, %arg8: memref<1x8xf32, #tpu.memory_space<vmem>>, %arg9: memref<1x8xf32, #tpu.memory_space<vmem>>, %arg10: memref<8x8xf32, #tpu.memory_space<vmem>>) attributes {dimension_semantics = [#tpu.dimension_semantics<parallel>, #tpu.dimension_semantics<parallel>, #tpu.dimension_semantics<parallel>, #tpu.dimension_semantics<arbitrary>], iteration_bounds = array<i64: 2, 4, 1, 1>, scalar_prefetch = 0 : i64, scratch_operands = 3 : i64, tpu.core_type = #tpu.core_type<tc>, window_params = [{transform_indices = @transform_0, window_bounds = array<i64: 1, 1, 8, 8>}, {transform_indices = @transform_1, window_bounds = array<i64: 1, 1, 8, 8>}, {transform_indices = @transform_2, window_bounds = array<i64: 1, 1, 8, 8>}, {transform_indices = @transform_3, window_bounds = array<i64: 1, 1, 8, 8>}]} {
    %c0_i32 = arith.constant 0 : i32
    %0 = arith.cmpi eq, %arg3, %c0_i32 : i32
    %1 = arith.extui %0 : i1 to i32
    %c0_i32_0 = arith.constant 0 : i32
    %2 = arith.cmpi ne, %1, %c0_i32_0 : i32
    scf.if %2 {
      %cst = arith.constant -1.000000e+30 : f32
      %12 = vector.broadcast %cst : f32 to vector<1x8xf32>
      %c0 = arith.constant 0 : index
      %c0_5 = arith.constant 0 : index
      %13 = vector.load %arg8[%c0, %c0_5] : memref<1x8xf32, #tpu.memory_space<vmem>>, vector<1x8xf32>
      tpu.vector_store %arg8[%c0, %c0_5], %12 {strides = array<i32>} : memref<1x8xf32, #tpu.memory_space<vmem>>, vector<1x8xf32>,
      %cst_6 = arith.constant 0.000000e+00 : f32
      %14 = vector.broadcast %cst_6 : f32 to vector<1x8xf32>
      %c0_7 = arith.constant 0 : index
      %c0_8 = arith.constant 0 : index
      %15 = vector.load %arg9[%c0_7, %c0_8] : memref<1x8xf32, #tpu.memory_space<vmem>>, vector<1x8xf32>
      tpu.vector_store %arg9[%c0_7, %c0_8], %14 {strides = array<i32>} : memref<1x8xf32, #tpu.memory_space<vmem>>, vector<1x8xf32>,
      %cst_9 = arith.constant 0.000000e+00 : f32
      %16 = vector.broadcast %cst_9 : f32 to vector<8x8xf32>
      %c0_10 = arith.constant 0 : index
      %c0_11 = arith.constant 0 : index
      %17 = vector.load %arg10[%c0_10, %c0_11] : memref<8x8xf32, #tpu.memory_space<vmem>>, vector<8x8xf32>
      tpu.vector_store %arg10[%c0_10, %c0_11], %16 {strides = array<i32>} : memref<8x8xf32, #tpu.memory_space<vmem>>, vector<8x8xf32>,
    } else {
    }
    %c8_i32 = arith.constant 8 : i32
    %3 = arith.muli %arg3, %c8_i32 : i32
    %c8_i32_1 = arith.constant 8 : i32
    %4 = arith.muli %arg2, %c8_i32_1 : i32
    %c7_i32 = arith.constant 7 : i32
    %5 = arith.addi %4, %c7_i32 : i32
    %6 = arith.cmpi sle, %3, %5 : i32
    %7 = arith.extui %6 : i1 to i32
    %c0_i32_2 = arith.constant 0 : i32
    %8 = arith.cmpi ne, %7, %c0_i32_2 : i32
    scf.if %8 {
      %c0 = arith.constant 0 : index
      %c0_5 = arith.constant 0 : index
      %c0_6 = arith.constant 0 : index
      %c0_7 = arith.constant 0 : index
      %12 = vector.load %arg4[%c0, %c0_5, %c0_6, %c0_7] : memref<1x1x8x8xbf16, #tpu.memory_space<vmem>>, vector<1x1x8x8xbf16>
      %13 = vector.shape_cast %12 : vector<1x1x8x8xbf16> to vector<8x8xbf16>
      %c0_8 = arith.constant 0 : index
      %c0_9 = arith.constant 0 : index
      %c0_10 = arith.constant 0 : index
      %c0_11 = arith.constant 0 : index
      %14 = vector.load %arg5[%c0_8, %c0_9, %c0_10, %c0_11] : memref<1x1x8x8xbf16, #tpu.memory_space<vmem>>, vector<1x1x8x8xbf16>
      %15 = vector.shape_cast %14 : vector<1x1x8x8xbf16> to vector<8x8xbf16>
      %c0_12 = arith.constant 0 : index
      %c0_13 = arith.constant 0 : index
      %c0_14 = arith.constant 0 : index
      %c0_15 = arith.constant 0 : index
      %16 = vector.load %arg6[%c0_12, %c0_13, %c0_14, %c0_15] : memref<1x1x8x8xbf16, #tpu.memory_space<vmem>>, vector<1x1x8x8xbf16>
      %17 = vector.shape_cast %16 : vector<1x1x8x8xbf16> to vector<8x8xbf16>
      %cst = arith.constant dense<0.000000e+00> : vector<8x8xf32>
      %18 = tpu.matmul %15, %13, %cst {dimension_numbers = #tpu.dot_dimension_numbers<[1], [1], [0], [0], [0, 0, 1, 0], [], []>} : vector<8x8xbf16>, vector<8x8xbf16>, vector<8x8xf32> -> vector<8x8xf32>
      %c8_i32_16 = arith.constant 8 : i32
      %19 = arith.muli %arg3, %c8_i32_16 : i32
      %20 = tpu.iota {dimensions = array<i32: 0>} : vector<8x8xi32>
      %21 = vector.broadcast %19 : i32 to vector<8x8xi32>
      %22 = arith.addi %21, %20 : vector<8x8xi32>
      %c8_i32_17 = arith.constant 8 : i32
      %23 = arith.muli %arg2, %c8_i32_17 : i32
      %24 = tpu.iota {dimensions = array<i32: 1>} : vector<8x8xi32>
      %25 = vector.broadcast %23 : i32 to vector<8x8xi32>
      %26 = arith.addi %25, %24 : vector<8x8xi32>
      %27 = arith.cmpi sle, %22, %26 : vector<8x8xi32>
      %cst_18 = arith.constant -1.000000e+30 : f32
      %28 = vector.broadcast %cst_18 : f32 to vector<8x8xf32>
      %29 = arith.select %27, %18, %28 : vector<8x8xi1>, vector<8x8xf32>
      %c0_19 = arith.constant 0 : index
      %c0_20 = arith.constant 0 : index
      %30 = vector.load %arg8[%c0_19, %c0_20] : memref<1x8xf32, #tpu.memory_space<vmem>>, vector<1x8xf32>
      %cst_21 = arith.constant dense<0xFF800000> : vector<8xf32>
      %31 = vector.multi_reduction <maximumf>, %29, %cst_21 [0] : vector<8x8xf32> to vector<8xf32>
      %32 = vector.shape_cast %31 : vector<8xf32> to vector<1x8xf32>
      %33 = arith.maximumf %30, %32 : vector<1x8xf32>
      %34 = arith.subf %30, %33 : vector<1x8xf32>
      %35 = math.exp %34 : vector<1x8xf32>
      %36 = vector.broadcast %33 : vector<1x8xf32> to vector<8x8xf32>
      %37 = arith.subf %29, %36 : vector<8x8xf32>
      %38 = math.exp %37 : vector<8x8xf32>
      %c0_22 = arith.constant 0 : index
      %c0_23 = arith.constant 0 : index
      %39 = vector.load %arg9[%c0_22, %c0_23] : memref<1x8xf32, #tpu.memory_space<vmem>>, vector<1x8xf32>
      %40 = arith.mulf %35, %39 : vector<1x8xf32>
      %cst_24 = arith.constant dense<0.000000e+00> : vector<8xf32>
      %41 = vector.multi_reduction <add>, %38, %cst_24 [0] : vector<8x8xf32> to vector<8xf32>
      %42 = vector.shape_cast %41 : vector<8xf32> to vector<1x8xf32>
      %43 = arith.addf %40, %42 : vector<1x8xf32>
      %c0_25 = arith.constant 0 : index
      %c0_26 = arith.constant 0 : index
      %44 = vector.load %arg9[%c0_25, %c0_26] : memref<1x8xf32, #tpu.memory_space<vmem>>, vector<1x8xf32>
      tpu.vector_store %arg9[%c0_25, %c0_26], %43 {strides = array<i32>} : memref<1x8xf32, #tpu.memory_space<vmem>>, vector<1x8xf32>,
      %c0_27 = arith.constant 0 : index
      %c0_28 = arith.constant 0 : index
      %45 = vector.load %arg10[%c0_27, %c0_28] : memref<8x8xf32, #tpu.memory_space<vmem>>, vector<8x8xf32>
      %46 = vector.broadcast %35 : vector<1x8xf32> to vector<8x8xf32>
      %47 = arith.mulf %46, %45 : vector<8x8xf32>
      %48 = arith.truncf %38 : vector<8x8xf32> to vector<8x8xbf16>
      %cst_29 = arith.constant dense<0.000000e+00> : vector<8x8xf32>
      %49 = tpu.matmul %17, %48, %cst_29 {dimension_numbers = #tpu.dot_dimension_numbers<[0], [0], [1], [1], [0, 1, 1, 1], [], []>} : vector<8x8xbf16>, vector<8x8xbf16>, vector<8x8xf32> -> vector<8x8xf32>
      %50 = arith.addf %47, %49 : vector<8x8xf32>
      %c0_30 = arith.constant 0 : index
      %c0_31 = arith.constant 0 : index
      %51 = vector.load %arg10[%c0_30, %c0_31] : memref<8x8xf32, #tpu.memory_space<vmem>>, vector<8x8xf32>
      tpu.vector_store %arg10[%c0_30, %c0_31], %50 {strides = array<i32>} : memref<8x8xf32, #tpu.memory_space<vmem>>, vector<8x8xf32>,
      %c0_32 = arith.constant 0 : index
      %c0_33 = arith.constant 0 : index
      %52 = vector.load %arg8[%c0_32, %c0_33] : memref<1x8xf32, #tpu.memory_space<vmem>>, vector<1x8xf32>
      tpu.vector_store %arg8[%c0_32, %c0_33], %33 {strides = array<i32>} : memref<1x8xf32, #tpu.memory_space<vmem>>, vector<1x8xf32>,
    } else {
    }
    %c0_i32_3 = arith.constant 0 : i32
    %9 = arith.cmpi eq, %arg3, %c0_i32_3 : i32
    %10 = arith.extui %9 : i1 to i32
    %c0_i32_4 = arith.constant 0 : i32
    %11 = arith.cmpi ne, %10, %c0_i32_4 : i32
    scf.if %11 {
      %c0 = arith.constant 0 : index
      %c0_5 = arith.constant 0 : index
      %12 = vector.load %arg9[%c0, %c0_5] : memref<1x8xf32, #tpu.memory_space<vmem>>, vector<1x8xf32>
      %13 = tpu.reciprocal %12 {approx = true} : vector<1x8xf32> -> vector<1x8xf32>
      %c0_6 = arith.constant 0 : index
      %c0_7 = arith.constant 0 : index
      %14 = vector.load %arg10[%c0_6, %c0_7] : memref<8x8xf32, #tpu.memory_space<vmem>>, vector<8x8xf32>
      %15 = vector.broadcast %13 : vector<1x8xf32> to vector<8x8xf32>
      %16 = arith.mulf %14, %15 : vector<8x8xf32>
      %17 = arith.truncf %16 : vector<8x8xf32> to vector<8x8xbf16>
      %c0_8 = arith.constant 0 : index
      %c0_9 = arith.constant 0 : index
      %c0_10 = arith.constant 0 : index
      %c0_11 = arith.constant 0 : index
      %18 = vector.load %arg7[%c0_8, %c0_9, %c0_10, %c0_11] : memref<1x1x8x8xbf16, #tpu.memory_space<vmem>>, vector<1x1x8x8xbf16>
      %19 = vector.shape_cast %18 : vector<1x1x8x8xbf16> to vector<8x8xbf16>
      %20 = vector.shape_cast %17 : vector<8x8xbf16> to vector<1x1x8x8xbf16>
      tpu.vector_store %arg7[%c0_8, %c0_9, %c0_10, %c0_11], %20 {strides = array<i32>} : memref<1x1x8x8xbf16, #tpu.memory_space<vmem>>, vector<1x1x8x8xbf16>,
    } else {
    }
    return
  }
  func.func @transform_0(%arg0: i32, %arg1: i32, %arg2: i32, %arg3: i32) -> (i32, i32, i32, i32) {
    %c0_i32 = arith.constant 0 : i32
    %c0_i32_0 = arith.constant 0 : i32
    return %arg0, %arg1, %arg2, %c0_i32 : i32, i32, i32, i32
  }
  func.func @transform_1(%arg0: i32, %arg1: i32, %arg2: i32, %arg3: i32) -> (i32, i32, i32, i32) {
    %c0_i32 = arith.constant 0 : i32
    %c0_i32_0 = arith.constant 0 : i32
    return %arg0, %arg1, %arg3, %c0_i32 : i32, i32, i32, i32
  }
  func.func @transform_2(%arg0: i32, %arg1: i32, %arg2: i32, %arg3: i32) -> (i32, i32, i32, i32) {
    %c0_i32 = arith.constant 0 : i32
    %c0_i32_0 = arith.constant 0 : i32
    return %arg0, %arg1, %arg3, %c0_i32 : i32, i32, i32, i32
  }
  func.func @transform_3(%arg0: i32, %arg1: i32, %arg2: i32, %arg3: i32) -> (i32, i32, i32, i32) {
    %c0_i32 = arith.constant 0 : i32
    %c0_i32_0 = arith.constant 0 : i32
    return %arg0, %arg1, %c0_i32, %arg2 : i32, i32, i32, i32
  }
}

module attributes {stable_mosaic.version = 11 : i64} {
  func.func @ffn_kernel(%arg0: i32, %arg1: i32, %arg2: i32, %arg3: memref<1x8x32xf32, #tpu.memory_space<vmem>>, %arg4: memref<1x8x32xbf16, #tpu.memory_space<vmem>>, %arg5: memref<32x32xbf16, #tpu.memory_space<vmem>>, %arg6: memref<1x32xf32, #tpu.memory_space<vmem>>, %arg7: memref<1x32xf32, #tpu.memory_space<vmem>>, %arg8: memref<1x32xf32, #tpu.memory_space<vmem>>, %arg9: memref<32x64xbf16, #tpu.memory_space<vmem>>, %arg10: memref<1x64xf32, #tpu.memory_space<vmem>>, %arg11: memref<64x32xbf16, #tpu.memory_space<vmem>>, %arg12: memref<1x32xf32, #tpu.memory_space<vmem>>, %arg13: memref<1x8x32xf32, #tpu.memory_space<vmem>>, %arg14: memref<8x32xf32, #tpu.memory_space<vmem>>, %arg15: memref<8x32xbf16, #tpu.memory_space<vmem>>, %arg16: memref<8x32xf32, #tpu.memory_space<vmem>>) attributes {dimension_semantics = [#tpu.dimension_semantics<parallel>, #tpu.dimension_semantics<parallel>, #tpu.dimension_semantics<arbitrary>], iteration_bounds = array<i64: 2, 1, 1>, scalar_prefetch = 0 : i64, scratch_operands = 3 : i64, tpu.core_type = #tpu.core_type<tc>, window_params = [{transform_indices = @transform_0, window_bounds = array<i64: 1, 8, 32>}, {transform_indices = @transform_1, window_bounds = array<i64: 1, 8, 32>}, {pipeline_mode = #tpu.pipeline_mode<synchronous>, transform_indices = @transform_2, window_bounds = array<i64: 32, 32>}, {pipeline_mode = #tpu.pipeline_mode<synchronous>, transform_indices = @transform_3, window_bounds = array<i64: 1, 32>}, {pipeline_mode = #tpu.pipeline_mode<synchronous>, transform_indices = @transform_4, window_bounds = array<i64: 1, 32>}, {pipeline_mode = #tpu.pipeline_mode<synchronous>, transform_indices = @transform_5, window_bounds = array<i64: 1, 32>}, {transform_indices = @transform_6, window_bounds = array<i64: 32, 64>}, {transform_indices = @transform_7, window_bounds = array<i64: 1, 64>}, {transform_indices = @transform_8, window_bounds = array<i64: 64, 32>}, {pipeline_mode = #tpu.pipeline_mode<synchronous>, transform_indices = @transform_9, window_bounds = array<i64: 1, 32>}, {transform_indices = @transform_10, window_bounds = array<i64: 1, 8, 32>}]} {
    %c0_i32 = arith.constant 0 : i32
    %0 = arith.cmpi eq, %arg2, %c0_i32 : i32
    %1 = arith.extui %0 : i1 to i32
    %c0_i32_0 = arith.constant 0 : i32
    %2 = arith.cmpi ne, %1, %c0_i32_0 : i32
    scf.if %2 {
      %c0_19 = arith.constant 0 : index
      %c0_20 = arith.constant 0 : index
      %c0_21 = arith.constant 0 : index
      %31 = vector.load %arg3[%c0_19, %c0_20, %c0_21] : memref<1x8x32xf32, #tpu.memory_space<vmem>>, vector<1x8x32xf32>
      %32 = vector.shape_cast %31 : vector<1x8x32xf32> to vector<8x32xf32>
      %c0_22 = arith.constant 0 : index
      %c0_23 = arith.constant 0 : index
      %c0_24 = arith.constant 0 : index
      %33 = vector.load %arg4[%c0_22, %c0_23, %c0_24] : memref<1x8x32xbf16, #tpu.memory_space<vmem>>, vector<1x8x32xbf16>
      %34 = vector.shape_cast %33 : vector<1x8x32xbf16> to vector<8x32xbf16>
      %c0_25 = arith.constant 0 : index
      %c0_26 = arith.constant 0 : index
      %35 = vector.load %arg5[%c0_25, %c0_26] : memref<32x32xbf16, #tpu.memory_space<vmem>>, vector<32x32xbf16>
      %cst_27 = arith.constant dense<0.000000e+00> : vector<8x32xf32>
      %36 = tpu.matmul %34, %35, %cst_27 {dimension_numbers = #tpu.dot_dimension_numbers<[1], [0], [0], [1], [0, 0, 1, 1], [], []>} : vector<8x32xbf16>, vector<32x32xbf16>, vector<8x32xf32> -> vector<8x32xf32>
      %c0_28 = arith.constant 0 : index
      %c0_29 = arith.constant 0 : index
      %37 = vector.load %arg6[%c0_28, %c0_29] : memref<1x32xf32, #tpu.memory_space<vmem>>, vector<1x32xf32>
      %38 = vector.broadcast %37 : vector<1x32xf32> to vector<8x32xf32>
      %39 = arith.addf %36, %38 : vector<8x32xf32>
      %40 = arith.addf %32, %39 : vector<8x32xf32>
      %c0_30 = arith.constant 0 : index
      %c0_31 = arith.constant 0 : index
      %41 = vector.load %arg14[%c0_30, %c0_31] : memref<8x32xf32, #tpu.memory_space<vmem>>, vector<8x32xf32>
      tpu.vector_store %arg14[%c0_30, %c0_31], %40 {strides = array<i32>} : memref<8x32xf32, #tpu.memory_space<vmem>>, vector<8x32xf32>,
      %c0_32 = arith.constant 0 : index
      %c0_33 = arith.constant 0 : index
      %42 = vector.load %arg7[%c0_32, %c0_33] : memref<1x32xf32, #tpu.memory_space<vmem>>, vector<1x32xf32>
      %c0_34 = arith.constant 0 : index
      %c0_35 = arith.constant 0 : index
      %43 = vector.load %arg8[%c0_34, %c0_35] : memref<1x32xf32, #tpu.memory_space<vmem>>, vector<1x32xf32>
      %cst_36 = arith.constant dense<0.000000e+00> : vector<8xf32>
      %44 = vector.multi_reduction <add>, %40, %cst_36 [1] : vector<8x32xf32> to vector<8xf32>
      %45 = vector.shape_cast %44 : vector<8xf32> to vector<8x1xf32>
      %cst_37 = arith.constant 3.200000e+01 : f32
      %46 = vector.broadcast %cst_37 : f32 to vector<8x1xf32>
      %47 = arith.divf %45, %46 : vector<8x1xf32>
      %48 = vector.broadcast %47 : vector<8x1xf32> to vector<8x32xf32>
      %49 = arith.subf %40, %48 : vector<8x32xf32>
      %50 = arith.mulf %49, %49 : vector<8x32xf32>
      %cst_38 = arith.constant dense<0.000000e+00> : vector<8xf32>
      %51 = vector.multi_reduction <add>, %50, %cst_38 [1] : vector<8x32xf32> to vector<8xf32>
      %52 = vector.shape_cast %51 : vector<8xf32> to vector<8x1xf32>
      %cst_39 = arith.constant 0.0322580636 : f32
      %53 = vector.broadcast %cst_39 : f32 to vector<8x1xf32>
      %54 = arith.mulf %52, %53 : vector<8x1xf32>
      %55 = math.sqrt %54 : vector<8x1xf32>
      %56 = vector.broadcast %42 : vector<1x32xf32> to vector<8x32xf32>
      %57 = arith.mulf %56, %49 : vector<8x32xf32>
      %cst_40 = arith.constant 9.99999997E-7 : f32
      %58 = vector.broadcast %cst_40 : f32 to vector<8x1xf32>
      %59 = arith.addf %55, %58 : vector<8x1xf32>
      %60 = tpu.reciprocal %59 {approx = true} : vector<8x1xf32> -> vector<8x1xf32>
      %61 = vector.broadcast %60 : vector<8x1xf32> to vector<8x32xf32>
      %62 = arith.mulf %57, %61 : vector<8x32xf32>
      %63 = vector.broadcast %43 : vector<1x32xf32> to vector<8x32xf32>
      %64 = arith.addf %62, %63 : vector<8x32xf32>
      %65 = arith.truncf %64 : vector<8x32xf32> to vector<8x32xbf16>
      %c0_41 = arith.constant 0 : index
      %c0_42 = arith.constant 0 : index
      %66 = vector.load %arg15[%c0_41, %c0_42] : memref<8x32xbf16, #tpu.memory_space<vmem>>, vector<8x32xbf16>
      tpu.vector_store %arg15[%c0_41, %c0_42], %65 {strides = array<i32>} : memref<8x32xbf16, #tpu.memory_space<vmem>>, vector<8x32xbf16>,
      %cst_43 = arith.constant 0.000000e+00 : f32
      %67 = vector.broadcast %cst_43 : f32 to vector<8x32xf32>
      %c0_44 = arith.constant 0 : index
      %c0_45 = arith.constant 0 : index
      %68 = vector.load %arg16[%c0_44, %c0_45] : memref<8x32xf32, #tpu.memory_space<vmem>>, vector<8x32xf32>
      tpu.vector_store %arg16[%c0_44, %c0_45], %67 {strides = array<i32>} : memref<8x32xf32, #tpu.memory_space<vmem>>, vector<8x32xf32>,
    } else {
    }
    %c0 = arith.constant 0 : index
    %c0_1 = arith.constant 0 : index
    %3 = vector.load %arg15[%c0, %c0_1] : memref<8x32xbf16, #tpu.memory_space<vmem>>, vector<8x32xbf16>
    %c0_2 = arith.constant 0 : index
    %c0_3 = arith.constant 0 : index
    %4 = vector.load %arg9[%c0_2, %c0_3] : memref<32x64xbf16, #tpu.memory_space<vmem>>, vector<32x64xbf16>
    %cst = arith.constant dense<0.000000e+00> : vector<8x64xf32>
    %5 = tpu.matmul %3, %4, %cst {dimension_numbers = #tpu.dot_dimension_numbers<[1], [0], [0], [1], [0, 0, 1, 1], [], []>} : vector<8x32xbf16>, vector<32x64xbf16>, vector<8x64xf32> -> vector<8x64xf32>
    %c0_4 = arith.constant 0 : index
    %c0_5 = arith.constant 0 : index
    %6 = vector.load %arg10[%c0_4, %c0_5] : memref<1x64xf32, #tpu.memory_space<vmem>>, vector<1x64xf32>
    %7 = vector.broadcast %6 : vector<1x64xf32> to vector<8x64xf32>
    %8 = arith.addf %5, %7 : vector<8x64xf32>
    %cst_6 = arith.constant 5.000000e-01 : f32
    %9 = vector.broadcast %cst_6 : f32 to vector<8x64xf32>
    %10 = arith.mulf %9, %8 : vector<8x64xf32>
    %11 = arith.mulf %8, %8 : vector<8x64xf32>
    %12 = arith.mulf %8, %11 : vector<8x64xf32>
    %cst_7 = arith.constant 4.471500e-02 : f32
    %13 = vector.broadcast %cst_7 : f32 to vector<8x64xf32>
    %14 = arith.mulf %13, %12 : vector<8x64xf32>
    %15 = arith.addf %8, %14 : vector<8x64xf32>
    %cst_8 = arith.constant 0.797884583 : f32
    %16 = vector.broadcast %cst_8 : f32 to vector<8x64xf32>
    %17 = arith.mulf %16, %15 : vector<8x64xf32>
    %18 = math.tanh %17 : vector<8x64xf32>
    %cst_9 = arith.constant 1.000000e+00 : f32
    %19 = vector.broadcast %cst_9 : f32 to vector<8x64xf32>
    %20 = arith.addf %19, %18 : vector<8x64xf32>
    %21 = arith.mulf %10, %20 : vector<8x64xf32>
    %c0_10 = arith.constant 0 : index
    %c0_11 = arith.constant 0 : index
    %22 = vector.load %arg16[%c0_10, %c0_11] : memref<8x32xf32, #tpu.memory_space<vmem>>, vector<8x32xf32>
    %23 = arith.truncf %21 : vector<8x64xf32> to vector<8x64xbf16>
    %c0_12 = arith.constant 0 : index
    %c0_13 = arith.constant 0 : index
    %24 = vector.load %arg11[%c0_12, %c0_13] : memref<64x32xbf16, #tpu.memory_space<vmem>>, vector<64x32xbf16>
    %cst_14 = arith.constant dense<0.000000e+00> : vector<8x32xf32>
    %25 = tpu.matmul %23, %24, %cst_14 {dimension_numbers = #tpu.dot_dimension_numbers<[1], [0], [0], [1], [0, 0, 1, 1], [], []>} : vector<8x64xbf16>, vector<64x32xbf16>, vector<8x32xf32> -> vector<8x32xf32>
    %26 = arith.addf %22, %25 : vector<8x32xf32>
    %c0_15 = arith.constant 0 : index
    %c0_16 = arith.constant 0 : index
    %27 = vector.load %arg16[%c0_15, %c0_16] : memref<8x32xf32, #tpu.memory_space<vmem>>, vector<8x32xf32>
    tpu.vector_store %arg16[%c0_15, %c0_16], %26 {strides = array<i32>} : memref<8x32xf32, #tpu.memory_space<vmem>>, vector<8x32xf32>,
    %c0_i32_17 = arith.constant 0 : i32
    %28 = arith.cmpi eq, %arg2, %c0_i32_17 : i32
    %29 = arith.extui %28 : i1 to i32
    %c0_i32_18 = arith.constant 0 : i32
    %30 = arith.cmpi ne, %29, %c0_i32_18 : i32
    scf.if %30 {
      %c0_19 = arith.constant 0 : index
      %c0_20 = arith.constant 0 : index
      %31 = vector.load %arg14[%c0_19, %c0_20] : memref<8x32xf32, #tpu.memory_space<vmem>>, vector<8x32xf32>
      %c0_21 = arith.constant 0 : index
      %c0_22 = arith.constant 0 : index
      %32 = vector.load %arg16[%c0_21, %c0_22] : memref<8x32xf32, #tpu.memory_space<vmem>>, vector<8x32xf32>
      %33 = arith.addf %31, %32 : vector<8x32xf32>
      %c0_23 = arith.constant 0 : index
      %c0_24 = arith.constant 0 : index
      %34 = vector.load %arg12[%c0_23, %c0_24] : memref<1x32xf32, #tpu.memory_space<vmem>>, vector<1x32xf32>
      %35 = vector.broadcast %34 : vector<1x32xf32> to vector<8x32xf32>
      %36 = arith.addf %33, %35 : vector<8x32xf32>
      %c0_25 = arith.constant 0 : index
      %c0_26 = arith.constant 0 : index
      %c0_27 = arith.constant 0 : index
      %37 = vector.load %arg13[%c0_25, %c0_26, %c0_27] : memref<1x8x32xf32, #tpu.memory_space<vmem>>, vector<1x8x32xf32>
      %38 = vector.shape_cast %37 : vector<1x8x32xf32> to vector<8x32xf32>
      %39 = vector.shape_cast %36 : vector<8x32xf32> to vector<1x8x32xf32>
      tpu.vector_store %arg13[%c0_25, %c0_26, %c0_27], %39 {strides = array<i32>} : memref<1x8x32xf32, #tpu.memory_space<vmem>>, vector<1x8x32xf32>,
    } else {
    }
    return
  }
  func.func @transform_0(%arg0: i32, %arg1: i32, %arg2: i32) -> (i32, i32, i32) {
    %c0_i32 = arith.constant 0 : i32
    %c0_i32_0 = arith.constant 0 : i32
    return %arg0, %arg1, %c0_i32 : i32, i32, i32
  }
  func.func @transform_1(%arg0: i32, %arg1: i32, %arg2: i32) -> (i32, i32, i32) {
    %c0_i32 = arith.constant 0 : i32
    %c0_i32_0 = arith.constant 0 : i32
    return %arg0, %arg1, %c0_i32 : i32, i32, i32
  }
  func.func @transform_2(%arg0: i32, %arg1: i32, %arg2: i32) -> (i32, i32) {
    %c0_i32 = arith.constant 0 : i32
    %c0_i32_0 = arith.constant 0 : i32
    %c0_i32_1 = arith.constant 0 : i32
    return %c0_i32, %c0_i32_0 : i32, i32
  }
  func.func @transform_3(%arg0: i32, %arg1: i32, %arg2: i32) -> (i32, i32) {
    %c0_i32 = arith.constant 0 : i32
    %c0_i32_0 = arith.constant 0 : i32
    %c0_i32_1 = arith.constant 0 : i32
    return %c0_i32, %c0_i32_0 : i32, i32
  }
  func.func @transform_4(%arg0: i32, %arg1: i32, %arg2: i32) -> (i32, i32) {
    %c0_i32 = arith.constant 0 : i32
    %c0_i32_0 = arith.constant 0 : i32
    %c0_i32_1 = arith.constant 0 : i32
    return %c0_i32, %c0_i32_0 : i32, i32
  }
  func.func @transform_5(%arg0: i32, %arg1: i32, %arg2: i32) -> (i32, i32) {
    %c0_i32 = arith.constant 0 : i32
    %c0_i32_0 = arith.constant 0 : i32
    %c0_i32_1 = arith.constant 0 : i32
    return %c0_i32, %c0_i32_0 : i32, i32
  }
  func.func @transform_6(%arg0: i32, %arg1: i32, %arg2: i32) -> (i32, i32) {
    %c0_i32 = arith.constant 0 : i32
    %c0_i32_0 = arith.constant 0 : i32
    return %c0_i32, %arg2 : i32, i32
  }
  func.func @transform_7(%arg0: i32, %arg1: i32, %arg2: i32) -> (i32, i32) {
    %c0_i32 = arith.constant 0 : i32
    %c0_i32_0 = arith.constant 0 : i32
    return %c0_i32, %arg2 : i32, i32
  }
  func.func @transform_8(%arg0: i32, %arg1: i32, %arg2: i32) -> (i32, i32) {
    %c0_i32 = arith.constant 0 : i32
    %c0_i32_0 = arith.constant 0 : i32
    return %arg2, %c0_i32 : i32, i32
  }
  func.func @transform_9(%arg0: i32, %arg1: i32, %arg2: i32) -> (i32, i32) {
    %c0_i32 = arith.constant 0 : i32
    %c0_i32_0 = arith.constant 0 : i32
    %c0_i32_1 = arith.constant 0 : i32
    return %c0_i32, %c0_i32_0 : i32, i32
  }
  func.func @transform_10(%arg0: i32, %arg1: i32, %arg2: i32) -> (i32, i32, i32) {
    %c0_i32 = arith.constant 0 : i32
    %c0_i32_0 = arith.constant 0 : i32
    return %arg0, %arg1, %c0_i32 : i32, i32, i32
  }
}

</mosaic_0001>

<llo_original>
// kernel: block_forward.4
$region0: #{block_forward.4}
  #allocation0 [shape = 'u32[]', space=smem, size = 0x4, offset = 0x4, fixed_abs, tag = 'smem constant byte address 0x4 - core index']
  #allocation1 [shape = 'u32[144,128]{1,0:T(1,128)}', space=vmem, size = 0x12000, scoped, tag = 'internal scratch']
  #allocation2 [shape = 'f32[1,8]{1,0:T(1,128)}', space=vmem, size = 0x200, scoped, tag = 'scratch operand']
  #allocation3 [shape = 'f32[1,8]{1,0:T(1,128)}', space=vmem, size = 0x200, scoped, tag = 'scratch operand']
  #allocation4 [shape = 'f32[8,8]{1,0:T(8,128)}', space=vmem, size = 0x1000, scoped, tag = 'scratch operand']
  %s0 = inlined_call_operand.vmem [shape: bf16[2,4,8,8], index: 0, kind: input, shape index: {}]
  %s1 = inlined_call_operand.vmem [shape: bf16[2,4,8,8], index: 1, kind: input, shape index: {}]
  %s2 = inlined_call_operand.vmem [shape: bf16[2,4,8,8], index: 2, kind: input, shape index: {}]
  %s3 = inlined_call_operand.vmem [shape: bf16[2,4,8,8], index: 3, kind: output, shape index: {}]
  %s4 = sld [smem:[#allocation0]]
  $region57: #{block_forward.4} parent=0
    _
  %s6 = ssub.s32 1, %s4
  %s7 = scalar_select 0, %s6, %s4
  loop: start=0, step=1, limit=10
  $region2: #{block_forward.4} parent=0 // loop_pre_header
    _
  $region3: #{block_forward.4} parent=0 // loop_header
    %s9 = sphi 0, %s13
    %p10 = scmp.ge.s32.totalorder %s9, 10
    %s16 = sphi 0, %s42
    %s17 = sphi 0, %s38
    %s18 = sphi 0, %s34
    %s19 = sphi 0, %s30
    %s20 = sphi 0, %s16
    %s21 = sphi 0, %s17
    %s22 = sphi 0, %s18
    %s23 = sphi 0, %s19
    %s24 = sphi 0, %s20
    %s25 = sphi 0, %s21
    %s26 = sphi 0, %s22
    %s27 = sphi 0, %s23
    %s49 = sphi 0, %s51
    %s52 = sphi 0, %s49
    %s53 = sphi 0, %s52
    %s69 = sphi 0, %s53
    %s79 = sphi 0, %s81
    %s82 = sphi 0, %s79
    %s83 = sphi 0, %s82
    %s99 = sphi 0, %s83
    %s109 = sphi 0, %s111
    %s112 = sphi 0, %s109
    %s113 = sphi 0, %s112
    %s129 = sphi 0, %s113
    %s139 = sphi 0, %s141
    %s142 = sphi 0, %s139
    %s143 = sphi 0, %s142
    %s159 = sphi 0, %s143
  $region4: #{block_forward.4} parent=0 // loop_header_branch
    %12 = sbr.rel (%p10) target = $region8
  $region5: #{block_forward.4} parent=0 // loop_body
    %s14 = ssub.s32 %s9, 1
    %s15 = ssub.s32 %s9, 2
    %s28 = sadd.s32 1, %s19
    %p29 = scmp.ge.s32.totalorder %s28, 1
    %s30 = scalar_select %p29, 0, %s28
    %s31 = sadd.s32 1, %s18
    %s32 = scalar_select %p29, %s31, %s18
    %p33 = scmp.ge.s32.totalorder %s32, 1
    %s34 = scalar_select %p33, 0, %s32
    %s35 = sadd.s32 1, %s17
    %s36 = scalar_select %p33, %s35, %s17
    %p37 = scmp.ge.s32.totalorder %s36, 4
    %s38 = scalar_select %p37, 0, %s36
    %s39 = sadd.s32 1, %s16
    %s40 = scalar_select %p37, %s39, %s16
    %p41 = scmp.ge.s32.totalorder %s40, 2
    %s42 = scalar_select %p41, 0, %s40
    %s43 = ssub.s32 %s16, %s42
    %s44 = ssub.s32 %s17, %s38
    %s45 = sor.u32 %s43, %s44
    %s46 = ssub.s32 %s18, %s34
    %s47 = sor.u32 %s45, %s46
    %p48 = scmp.eq.s32.totalorder %s47, 0
    %s50 = sadd.s32 %s49, 1
    %s51 = scalar_select %p48, %s49, %s50
    %p54 = pneg %p48
    %p55 = scmp.eq.s32.totalorder %s9, 7
    %p56 = por %p54, %p55
    %p57 = scmp.ne.s32.totalorder %s49, %s52
    %p58 = scmp.eq.s32.totalorder %s9, 0
    %p59 = por %p57, %p58
    %p60 = scmp.ne.s32.totalorder %s49, %s52
    %p61 = scmp.eq.s32.totalorder %s14, 7
    %p62 = por %p60, %p61
    %p63 = scmp.ne.s32.totalorder %s52, %s53
    %p64 = scmp.eq.s32.totalorder %s14, 0
    %p65 = por %p63, %p64
    %p66 = scmp.ne.s32.totalorder %s52, %s53
    %p67 = scmp.eq.s32.totalorder %s15, 7
    %p68 = por %p66, %p67
    %p70 = scmp.ne.s32.totalorder %s53, %s69
    %p71 = scmp.eq.s32.totalorder %s15, 0
    %p72 = por %p70, %p71
    %s73 = ssub.s32 %s16, %s42
    %s74 = ssub.s32 %s17, %s38
    %s75 = sor.u32 %s73, %s74
    %s76 = ssub.s32 %s19, %s30
    %s77 = sor.u32 %s75, %s76
    %p78 = scmp.eq.s32.totalorder %s77, 0
    %s80 = sadd.s32 %s79, 1
    %s81 = scalar_select %p78, %s79, %s80
    %p84 = pneg %p78
    %p85 = scmp.eq.s32.totalorder %s9, 7
    %p86 = por %p84, %p85
    %p87 = scmp.ne.s32.totalorder %s79, %s82
    %p88 = scmp.eq.s32.totalorder %s9, 0
    %p89 = por %p87, %p88
    %p90 = scmp.ne.s32.totalorder %s79, %s82
    %p91 = scmp.eq.s32.totalorder %s14, 7
    %p92 = por %p90, %p91
    %p93 = scmp.ne.s32.totalorder %s82, %s83
    %p94 = scmp.eq.s32.totalorder %s14, 0
    %p95 = por %p93, %p94
    %p96 = scmp.ne.s32.totalorder %s82, %s83
    %p97 = scmp.eq.s32.totalorder %s15, 7
    %p98 = por %p96, %p97
    %p100 = scmp.ne.s32.totalorder %s83, %s99
    %p101 = scmp.eq.s32.totalorder %s15, 0
    %p102 = por %p100, %p101
    %s103 = ssub.s32 %s16, %s42
    %s104 = ssub.s32 %s17, %s38
    %s105 = sor.u32 %s103, %s104
    %s106 = ssub.s32 %s19, %s30
    %s107 = sor.u32 %s105, %s106
    %p108 = scmp.eq.s32.totalorder %s107, 0
    %s110 = sadd.s32 %s109, 1
    %s111 = scalar_select %p108, %s109, %s110
    %p114 = pneg %p108
    %p115 = scmp.eq.s32.totalorder %s9, 7
    %p116 = por %p114, %p115
    %p117 = scmp.ne.s32.totalorder %s109, %s112
    %p118 = scmp.eq.s32.totalorder %s9, 0
    %p119 = por %p117, %p118
    %p120 = scmp.ne.s32.totalorder %s109, %s112
    %p121 = scmp.eq.s32.totalorder %s14, 7
    %p122 = por %p120, %p121
    %p123 = scmp.ne.s32.totalorder %s112, %s113
    %p124 = scmp.eq.s32.totalorder %s14, 0
    %p125 = por %p123, %p124
    %p126 = scmp.ne.s32.totalorder %s112, %s113
    %p127 = scmp.eq.s32.totalorder %s15, 7
    %p128 = por %p126, %p127
    %p130 = scmp.ne.s32.totalorder %s113, %s129
    %p131 = scmp.eq.s32.totalorder %s15, 0
    %p132 = por %p130, %p131
    %s133 = ssub.s32 %s16, %s42
    %s134 = ssub.s32 %s17, %s38
    %s135 = sor.u32 %s133, %s134
    %s136 = ssub.s32 %s18, %s34
    %s137 = sor.u32 %s135, %s136
    %p138 = scmp.eq.s32.totalorder %s137, 0
    %s140 = sadd.s32 %s139, 1
    %s141 = scalar_select %p138, %s139, %s140
    %p144 = pneg %p138
    %p145 = scmp.eq.s32.totalorder %s9, 7
    %p146 = por %p144, %p145
    %p147 = scmp.ne.s32.totalorder %s139, %s142
    %p148 = scmp.eq.s32.totalorder %s9, 0
    %p149 = por %p147, %p148
    %p150 = scmp.ne.s32.totalorder %s139, %s142
    %p151 = scmp.eq.s32.totalorder %s14, 7
    %p152 = por %p150, %p151
    %p153 = scmp.ne.s32.totalorder %s142, %s143
    %p154 = scmp.eq.s32.totalorder %s14, 0
    %p155 = por %p153, %p154
    %p156 = scmp.ne.s32.totalorder %s142, %s143
    %p157 = scmp.eq.s32.totalorder %s15, 7
    %p158 = por %p156, %p157
    %p160 = scmp.ne.s32.totalorder %s143, %s159
    %p161 = scmp.eq.s32.totalorder %s15, 0
    %p162 = por %p160, %p161
    %p163 = scmp.le.s32.totalorder 1, %s9
    %p164 = scmp.lt.s32.totalorder %s9, 9
    %p165 = pnand %p163, %p164
    %p166 = pneg %p165
    // Predicated region
    $region9: #{block_forward.4} parent=5 // pred_check
      _
    $region10: #{block_forward.4} parent=5 // pred_check_branch
      %168 = sbr.rel (%p165) target = $region12
    $region11: #{block_forward.4} parent=5 // pred_region
      %s169 = ssub.s32 %s9, 1
    $region12: #{block_forward.4} parent=5 // pred_fallthru
      _
    %p170 = scmp.lt.s32.totalorder %s9, 8
    // Predicated region
    $region13: #{block_forward.4} parent=5 // pred_check
      %p171 = pneg %p170
    $region14: #{block_forward.4} parent=5 // pred_check_branch
      %173 = sbr.rel (%p171) target = $region16
    $region15: #{block_forward.4} parent=5 // pred_region
      // Predicated region
      $region17: #{block_forward.4} parent=15 // pred_check
        %p174 = pneg %p59
      $region18: #{block_forward.4} parent=15 // pred_check_branch
        %176 = sbr.rel (%p174) target = $region20
      $region19: #{block_forward.4} parent=15 // pred_region
        %p177 = scmp.lt.s32.totalorder %s16, 1
        %s178 = scalar_select %p177, %s16, 1
        %p179 = scmp.lt.s32.totalorder %s17, 3
        %s180 = scalar_select %p179, %s17, 3
        %p181 = scmp.lt.s32.totalorder %s18, 0
        %s182 = scalar_select %p181, %s18, 0
        %s183 = sadd.s32 %s182, %s180
        %s184 = smul.addr %s178, 4
        %s185 = sadd.s32 %s183, %s184
        %s186 = smul.addr %s185, 4
        %s187 = scalar_lea.vmem %s0, %s186
      $region20: #{block_forward.4} parent=15 // pred_fallthru
        _
      // Predicated region
      $region21: #{block_forward.4} parent=15 // pred_check
        %p188 = pneg %p89
      $region22: #{block_forward.4} parent=15 // pred_check_branch
        %190 = sbr.rel (%p188) target = $region24
      $region23: #{block_forward.4} parent=15 // pred_region
        %p191 = scmp.lt.s32.totalorder %s16, 1
        %s192 = scalar_select %p191, %s16, 1
        %p193 = scmp.lt.s32.totalorder %s17, 3
        %s194 = scalar_select %p193, %s17, 3
        %p195 = scmp.lt.s32.totalorder %s19, 0
        %s196 = scalar_select %p195, %s19, 0
        %s197 = sadd.s32 %s196, %s194
        %s198 = smul.addr %s192, 4
        %s199 = sadd.s32 %s197, %s198
        %s200 = smul.addr %s199, 4
        %s201 = scalar_lea.vmem %s1, %s200
      $region24: #{block_forward.4} parent=15 // pred_fallthru
        _
      // Predicated region
      $region25: #{block_forward.4} parent=15 // pred_check
        %p202 = pneg %p119
      $region26: #{block_forward.4} parent=15 // pred_check_branch
        %204 = sbr.rel (%p202) target = $region28
      $region27: #{block_forward.4} parent=15 // pred_region
        %p205 = scmp.lt.s32.totalorder %s16, 1
        %s206 = scalar_select %p205, %s16, 1
        %p207 = scmp.lt.s32.totalorder %s17, 3
        %s208 = scalar_select %p207, %s17, 3
        %p209 = scmp.lt.s32.totalorder %s19, 0
        %s210 = scalar_select %p209, %s19, 0
        %s211 = sadd.s32 %s210, %s208
        %s212 = smul.addr %s206, 4
        %s213 = sadd.s32 %s211, %s212
        %s214 = smul.addr %s213, 4
        %s215 = scalar_lea.vmem %s2, %s214
      $region28: #{block_forward.4} parent=15 // pred_fallthru
        _
    $region16: #{block_forward.4} parent=5 // pred_fallthru
      _
    %p216 = scmp.le.s32.totalorder 1, %s9
    %p217 = scmp.lt.s32.totalorder %s9, 9
    %p218 = pnand %p216, %p217
    %p219 = pneg %p218
    // Predicated region
    $region29: #{block_forward.4} parent=5 // pred_check
      _
    $region30: #{block_forward.4} parent=5 // pred_check_branch
      %221 = sbr.rel (%p218) target = $region32
    $region31: #{block_forward.4} parent=5 // pred_region
      %s222 = ssub.s32 %s9, 1
      %p223 = scmp.lt.s32.totalorder %s20, 1
      %s224 = scalar_select %p223, %s20, 1
      %p225 = scmp.lt.s32.totalorder %s21, 3
      %s226 = scalar_select %p225, %s21, 3
      %p227 = scmp.lt.s32.totalorder %s22, 0
      %s228 = scalar_select %p227, %s22, 0
      %s229 = sadd.s32 %s228, %s226
      %s230 = smul.addr %s224, 4
      %s231 = sadd.s32 %s229, %s230
      %s232 = smul.addr %s231, 4
      %s233 = scalar_lea.vmem %s0, %s232
      %p234 = pneg %p65
      %p235 = pneg %p62
      %p236 = scmp.lt.s32.totalorder %s20, 1
      %s237 = scalar_select %p236, %s20, 1
      %p238 = scmp.lt.s32.totalorder %s21, 3
      %s239 = scalar_select %p238, %s21, 3
      %p240 = scmp.lt.s32.totalorder %s23, 0
      %s241 = scalar_select %p240, %s23, 0
      %s242 = sadd.s32 %s241, %s239
      %s243 = smul.addr %s237, 4
      %s244 = sadd.s32 %s242, %s243
      %s245 = smul.addr %s244, 4
      %s246 = scalar_lea.vmem %s1, %s245
      %p247 = pneg %p95
      %p248 = pneg %p92
      %p249 = scmp.lt.s32.totalorder %s20, 1
      %s250 = scalar_select %p249, %s20, 1
      %p251 = scmp.lt.s32.totalorder %s21, 3
      %s252 = scalar_select %p251, %s21, 3
      %p253 = scmp.lt.s32.totalorder %s23, 0
      %s254 = scalar_select %p253, %s23, 0
      %s255 = sadd.s32 %s254, %s252
      %s256 = smul.addr %s250, 4
      %s257 = sadd.s32 %s255, %s256
      %s258 = smul.addr %s257, 4
      %s259 = scalar_lea.vmem %s2, %s258
      %p260 = pneg %p125
      %p261 = pneg %p122
      %p262 = pneg %p155
      %p263 = pneg %p152
      %p264 = scmp.lt.s32.totalorder %s20, 1
      %s265 = scalar_select %p264, %s20, 1
      %p266 = scmp.lt.s32.totalorder %s21, 3
      %s267 = scalar_select %p266, %s21, 3
      %p268 = scmp.lt.s32.totalorder %s22, 0
      %s269 = scalar_select %p268, %s22, 0
      %s270 = sadd.s32 %s269, %s267
      %s271 = smul.addr %s265, 4
      %s272 = sadd.s32 %s270, %s271
      %s273 = smul.addr %s272, 4
      %s274 = scalar_lea.vmem %s3, %s273
      %p275 = scmp.lt.s32.totalorder %s20, 1
      %s276 = scalar_select %p275, %s20, 1
      %p277 = scmp.lt.s32.totalorder %s21, 3
      %s278 = scalar_select %p277, %s21, 3
      %p279 = scmp.lt.s32.totalorder %s22, 0
      %s280 = scalar_select %p279, %s22, 0
      %s281 = sadd.s32 %s280, %s278
      %s282 = smul.addr %s276, 4
      %s283 = sadd.s32 %s281, %s282
      %s284 = smul.addr %s283, 4
      %s285 = scalar_lea.vmem %s0, %s284
      %p286 = scmp.lt.s32.totalorder %s20, 1
      %s287 = scalar_select %p286, %s20, 1
      %p288 = scmp.lt.s32.totalorder %s21, 3
      %s289 = scalar_select %p288, %s21, 3
      %p290 = scmp.lt.s32.totalorder %s23, 0
      %s291 = scalar_select %p290, %s23, 0
      %s292 = sadd.s32 %s291, %s289
      %s293 = smul.addr %s287, 4
      %s294 = sadd.s32 %s292, %s293
      %s295 = smul.addr %s294, 4
      %s296 = scalar_lea.vmem %s1, %s295
      %p297 = scmp.lt.s32.totalorder %s20, 1
      %s298 = scalar_select %p297, %s20, 1
      %p299 = scmp.lt.s32.totalorder %s21, 3
      %s300 = scalar_select %p299, %s21, 3
      %p301 = scmp.lt.s32.totalorder %s23, 0
      %s302 = scalar_select %p301, %s23, 0
      %s303 = sadd.s32 %s302, %s300
      %s304 = smul.addr %s298, 4
      %s305 = sadd.s32 %s303, %s304
      %s306 = smul.addr %s305, 4
      %s307 = scalar_lea.vmem %s2, %s306
      %p308 = scmp.lt.s32.totalorder %s20, 1
      %s309 = scalar_select %p308, %s20, 1
      %p310 = scmp.lt.s32.totalorder %s21, 3
      %s311 = scalar_select %p310, %s21, 3
      %p312 = scmp.lt.s32.totalorder %s22, 0
      %s313 = scalar_select %p312, %s22, 0
      %s314 = sadd.s32 %s313, %s311
      %s315 = smul.addr %s309, 4
      %s316 = sadd.s32 %s314, %s315
      %s317 = smul.addr %s316, 4
      %s318 = scalar_lea.vmem %s3, %s317
      %p320 = scmp.eq.s32.totalorder %s23, 0
      // Predicated region
      $region33: #{block_forward.4} parent=31 // pred_check
        %p321 = pneg %p320
      $region34: #{block_forward.4} parent=31 // pred_check_branch
        %323 = sbr.rel (%p321) target = $region36
      $region35: #{block_forward.4} parent=31 // pred_region
        %vm324 = vcmask 57344
        %325 = vst.msk [vmem:[#allocation2] sm:$0x1] %vm324, -1e+30
        %326 = vst.msk [vmem:[#allocation3] sm:$0x1] %vm324, 0.0
        %vm327 = vcmask 64512
        %328 = vst.msk [vmem:[#allocation4] sm:$0xff] %vm327, 0.0
      $region36: #{block_forward.4} parent=31 // pred_fallthru
        _
      %s329 = smul.u32 %s23, 8
      %s330 = smul.u32 %s22, 8
      %s331 = sadd.s32 %s330, 7
      %p332 = scmp.le.s32.totalorder %s329, %s331
      // Predicated region
      $region37: #{block_forward.4} parent=31 // pred_check
        %p333 = pneg %p332
      $region38: #{block_forward.4} parent=31 // pred_check_branch
        %335 = sbr.rel (%p333) target = $region40
      $region39: #{block_forward.4} parent=31 // pred_region
        %v336 = vld [vmem:[%s285] sm:$0xf]
        %v337 = vld [vmem:[%s296] sm:$0xf]
        %v338 = vld [vmem:[%s307] sm:$0xf]
        %vm339 = vcmask 64512
        %v341 = vsel %vm339, %v337, 0
        %v344 = vsel %vm339, %v336, 0
        %346 = vmatprep.subr.bf16.mxu0 0
        %347 = vmatpush1.bf16.xpose.msra.mxu0 0
        %348 = vmatprep.subr.bf16.mxu0 0
        %349 = vmatpush1.bf16.xpose.msra.mxu0 0
        %350 = vmatprep.subr.bf16.mxu0 0
        %351 = vmatpush1.bf16.xpose.msra.mxu0 0
        %352 = vmatprep.subr.bf16.mxu0 0
        %353 = vmatpush1.bf16.xpose.msra.mxu0 0
        %354 = vmatprep.subr.bf16.mxu0 0
        %355 = vmatpush1.bf16.xpose.msra.mxu0 0
        %356 = vmatprep.subr.bf16.mxu0 0
        %357 = vmatpush1.bf16.xpose.msra.mxu0 0
        %358 = vmatprep.subr.bf16.mxu0 0
        %359 = vmatpush1.bf16.xpose.msra.mxu0 0
        %360 = vmatprep.subr.bf16.mxu0 0
        %361 = vmatpush1.bf16.xpose.msra.mxu0 %v344
        %362 = vmatprep.subr.bf16.mxu0 0
        %363 = vmatpush2.bf16.xpose.msra.mxu0 0
        %364 = vmatprep.subr.bf16.mxu0 0
        %365 = vmatpush2.bf16.xpose.msra.mxu0 0
        %366 = vmatprep.subr.bf16.mxu0 0
        %367 = vmatpush2.bf16.xpose.msra.mxu0 0
        %368 = vmatprep.subr.bf16.mxu0 0
        %369 = vmatpush2.bf16.xpose.msra.mxu0 0
        %370 = vmatprep.subr.bf16.mxu0 0
        %371 = vmatpush2.bf16.xpose.msra.mxu0 0
        %372 = vmatprep.subr.bf16.mxu0 0
        %373 = vmatpush2.bf16.xpose.msra.mxu0 0
        %374 = vmatprep.subr.bf16.mxu0 0
        %375 = vmatpush2.bf16.xpose.msra.mxu0 0
        %376 = vmatprep.subr.bf16.mxu0 0
        %377 = vmatpush2.bf16.xpose.msra.mxu0 0
        %378 = vmatprep.mubr.bf16.mxu0 0
        %379 = vmatmul.mubr.bf16.gmra.mxu0 %v341
        %v380 = vpop.f32.mrf.mxu0
        %v381 = vadd.f32 0.0, %v380
        %v382 = vpop.f32.mrf.mxu0
        %v383 = vpop.f32.mrf.mxu0
        %v384 = vpop.f32.mrf.mxu0
        %385 = vdwg.mxu0
        %v386 = vlaneseq
        %v387 = vshrl.u32 %v386, 7
        %v388 = vstv %s329
        %v389 = vadd.s32 %v388, %v387
        %v390 = vlaneseq
        %v391 = vand.u32 %v390, 127
        %v392 = vstv %s330
        %v393 = vadd.s32 %v392, %v391
        %vm394 = vcmp.le.s32.totalorder %v389, %v393
        %v395 = vsel %vm394, %v381, -1e+30
        %v396 = vld [vmem:[#allocation2] sm:$0x1]
        %v397 = vsel %vm339, %v395, -inf
        %v398 = vrot.slane %v397, 4
        %v399 = vmax.f32 %v397, %v398
        %v400 = vrot.slane %v399, 2
        %v401 = vmax.f32 %v399, %v400
        %v402 = vrot.slane %v401, 1
        %v403 = vmax.f32 %v401, %v402
        %v404 = vmax.f32 %v396, %v403
        %v405 = vsub.f32 %v396, %v404
        %v406 = vmul.f32 %v405, 1.442695
        %v407 = vpow.pop %v406
        %v409 = vlaneseq
        %v410 = vshrl.u32 %v409, 7
        %v411 = vsub.s32 0, %v410
        %v412 = vrot.slane %v404, %v411
        %v414 = vsub.f32 %v395, %v412
        %v415 = vmul.f32 %v414, 1.442695
        %v416 = vpow.pop %v415
        %v417 = vld [vmem:[#allocation3] sm:$0x1]
        %v418 = vmul.f32 %v407, %v417
        %v419 = vsel %vm339, %v416, 0.0
        %v420 = vrot.slane %v419, 4
        %v421 = vadd.f32 %v419, %v420
        %v422 = vrot.slane %v421, 2
        %v423 = vadd.f32 %v421, %v422
        %v424 = vrot.slane %v423, 1
        %v425 = vadd.f32 %v423, %v424
        %v426 = vadd.f32 %v418, %v425
        %vm427 = vcmask 57344
        %428 = vst.msk [vmem:[#allocation3] sm:$0x1] %vm427, %v426
        %v429 = vld [vmem:[#allocation4] sm:$0xff]
        %v431 = vlaneseq
        %v432 = vshrl.u32 %v431, 7
        %v433 = vsub.s32 0, %v432
        %v434 = vrot.slane %v407, %v433
        %v436 = vmul.f32 %v434, %v429
        %v437 = vpack.c.bf16 %v416, %v416
        %438 = vxpose.xlu0.c.b16.start [1/8] %v338, 128
        %439 = vxpose.xlu0.c.b16.cont [2/8] 0, 128
        %440 = vxpose.xlu0.c.b16.cont [3/8] 0, 128
        %441 = vxpose.xlu0.c.b16.cont [4/8] 0, 128
        %442 = vxpose.xlu0.c.b16.cont [5/8] 0, 128
        %443 = vxpose.xlu0.c.b16.cont [6/8] 0, 128
        %444 = vxpose.xlu0.c.b16.cont [7/8] 0, 128
        %445 = vxpose.xlu0.c.b16.end [8/8] 0, 128
        %v446 = vpop.trf.xlu0
        %v447 = vpop.trf.xlu0
        %v448 = vpop.trf.xlu0
        %v449 = vpop.trf.xlu0
        %v450 = vpop.trf.xlu0
        %v451 = vpop.trf.xlu0
        %v452 = vpop.trf.xlu0
        %v453 = vpop.trf.xlu0
        %v455 = vsel %vm339, %v446, 0
        %vm457 = vcmask 1043456
        %v459 = vsel %vm457, %v437, 0
        %461 = vmatprep.subr.bf16.mxu0 0
        %462 = vmatpush1.bf16.msra.mxu0 0
        %463 = vmatprep.subr.bf16.mxu0 0
        %464 = vmatpush1.bf16.msra.mxu0 0
        %465 = vmatprep.subr.bf16.mxu0 0
        %466 = vmatpush1.bf16.msra.mxu0 0
        %467 = vmatprep.subr.bf16.mxu0 0
        %468 = vmatpush1.bf16.msra.mxu0 0
        %469 = vmatprep.subr.bf16.mxu0 0
        %470 = vmatpush1.bf16.msra.mxu0 0
        %471 = vmatprep.subr.bf16.mxu0 0
        %472 = vmatpush1.bf16.msra.mxu0 0
        %473 = vmatprep.subr.bf16.mxu0 0
        %474 = vmatpush1.bf16.msra.mxu0 0
        %475 = vmatprep.subr.bf16.mxu0 0
        %476 = vmatpush1.bf16.msra.mxu0 %v459
        %477 = vmatprep.subr.bf16.mxu0 0
        %478 = vmatpush2.bf16.msra.mxu0 0
        %479 = vmatprep.subr.bf16.mxu0 0
        %480 = vmatpush2.bf16.msra.mxu0 0
        %481 = vmatprep.subr.bf16.mxu0 0
        %482 = vmatpush2.bf16.msra.mxu0 0
        %483 = vmatprep.subr.bf16.mxu0 0
        %484 = vmatpush2.bf16.msra.mxu0 0
        %485 = vmatprep.subr.bf16.mxu0 0
        %486 = vmatpush2.bf16.msra.mxu0 0
        %487 = vmatprep.subr.bf16.mxu0 0
        %488 = vmatpush2.bf16.msra.mxu0 0
        %489 = vmatprep.subr.bf16.mxu0 0
        %490 = vmatpush2.bf16.msra.mxu0 0
        %491 = vmatprep.subr.bf16.mxu0 0
        %492 = vmatpush2.bf16.msra.mxu0 0
        %493 = vmatprep.mubr.bf16.mxu0 0
        %494 = vmatmul.mubr.bf16.gmra.mxu0 %v455
        %v495 = vpop.f32.mrf.mxu0
        %v496 = vadd.f32 0.0, %v495
        %v497 = vpop.f32.mrf.mxu0
        %v498 = vpop.f32.mrf.mxu0
        %v499 = vpop.f32.mrf.mxu0
        %500 = vdwg.mxu0
        %v501 = vadd.f32 %v436, %v496
        %502 = vst.msk [vmem:[#allocation4] sm:$0xff] %vm339, %v501
        %503 = vst.msk [vmem:[#allocation2] sm:$0x1] %vm427, %v404
      $region40: #{block_forward.4} parent=31 // pred_fallthru
        _
      // Predicated region
      $region41: #{block_forward.4} parent=31 // pred_check
        %p504 = pneg %p320
      $region42: #{block_forward.4} parent=31 // pred_check_branch
        %506 = sbr.rel (%p504) target = $region44
      $region43: #{block_forward.4} parent=31 // pred_region
        %v507 = vld [vmem:[#allocation3] sm:$0x1]
        %v508 = vrcp.pop %v507
        %v509 = vld [vmem:[#allocation4] sm:$0xff]
        %v511 = vlaneseq
        %v512 = vshrl.u32 %v511, 7
        %v513 = vsub.s32 0, %v512
        %v514 = vrot.slane %v508, %v513
        %v516 = vmul.f32 %v509, %v514
        %v517 = vpack.c.bf16 %v516, %v516
        %vm518 = vcmask 60416
        %519 = vst.msk [vmem:[%s318] sm:$0xf] %vm518, %v517
      $region44: #{block_forward.4} parent=31 // pred_fallthru
        _
      %p520 = scmp.lt.s32.totalorder %s20, 1
      %s521 = scalar_select %p520, %s20, 1
      %p522 = scmp.lt.s32.totalorder %s21, 3
      %s523 = scalar_select %p522, %s21, 3
      %p524 = scmp.lt.s32.totalorder %s22, 0
      %s525 = scalar_select %p524, %s22, 0
      %s526 = sadd.s32 %s525, %s523
      %s527 = smul.addr %s521, 4
      %s528 = sadd.s32 %s526, %s527
      %s529 = smul.addr %s528, 4
      %s530 = scalar_lea.vmem %s3, %s529
      // Predicated region
      $region45: #{block_forward.4} parent=31 // pred_check
        %p531 = pneg %p152
      $region46: #{block_forward.4} parent=31 // pred_check_branch
        %533 = sbr.rel (%p531) target = $region48
      $region47: #{block_forward.4} parent=31 // pred_region
        _
      $region48: #{block_forward.4} parent=31 // pred_fallthru
        _
    $region32: #{block_forward.4} parent=5 // pred_fallthru
      _
    %p534 = scmp.le.s32.totalorder 2, %s9
    // Predicated region
    $region49: #{block_forward.4} parent=5 // pred_check
      %p535 = pneg %p534
    $region50: #{block_forward.4} parent=5 // pred_check_branch
      %537 = sbr.rel (%p535) target = $region52
    $region51: #{block_forward.4} parent=5 // pred_region
      %s538 = ssub.s32 %s9, 2
      // Predicated region
      $region53: #{block_forward.4} parent=51 // pred_check
        %p539 = pneg %p158
      $region54: #{block_forward.4} parent=51 // pred_check_branch
        %541 = sbr.rel (%p539) target = $region56
      $region55: #{block_forward.4} parent=51 // pred_region
        %p542 = scmp.lt.s32.totalorder %s24, 1
        %s543 = scalar_select %p542, %s24, 1
        %p544 = scmp.lt.s32.totalorder %s25, 3
        %s545 = scalar_select %p544, %s25, 3
        %p546 = scmp.lt.s32.totalorder %s26, 0
        %s547 = scalar_select %p546, %s26, 0
        %s548 = sadd.s32 %s547, %s545
        %s549 = smul.addr %s543, 4
        %s550 = sadd.s32 %s548, %s549
        %s551 = smul.addr %s550, 4
        %s552 = scalar_lea.vmem %s3, %s551
      $region56: #{block_forward.4} parent=51 // pred_fallthru
        _
    $region52: #{block_forward.4} parent=5 // pred_fallthru
      _
  $region6: #{block_forward.4} parent=0 // loop_footer
    %s13 = sadd.s32 1, %s9
  $region7: #{block_forward.4} parent=0 // loop_footer_branch
    %8 = sbr.rel target = $region3
  $region8: #{block_forward.4} parent=0 // loop_exit
    _

// kernel: block_forward.3
$region0: #{block_forward.3}
  #allocation0 [shape = 'u32[]', space=smem, size = 0x4, offset = 0x4, fixed_abs, tag = 'smem constant byte address 0x4 - core index']
  #allocation1 [shape = 'u32[144,128]{1,0:T(1,128)}', space=vmem, size = 0x12000, scoped, tag = 'internal scratch']
  %s0 = inlined_call_operand.vmem [shape: f32[2,8,32], index: 0, kind: input, shape index: {}]
  %s1 = inlined_call_operand.vmem [shape: f32[1,32], index: 1, kind: input, shape index: {}]
  %s2 = inlined_call_operand.vmem [shape: f32[1,32], index: 2, kind: input, shape index: {}]
  %s3 = inlined_call_operand.vmem [shape: bf16[32,96], index: 3, kind: input, shape index: {}]
  %s4 = inlined_call_operand.vmem [shape: f32[1,96], index: 4, kind: input, shape index: {}]
  %s5 = inlined_call_operand.vmem [shape: bf16[2,4,8,8], index: 5, kind: output, shape index: {0}]
  %s6 = inlined_call_operand.vmem [shape: bf16[2,4,8,8], index: 6, kind: output, shape index: {1}]
  %s7 = inlined_call_operand.vmem [shape: bf16[2,4,8,8], index: 7, kind: output, shape index: {2}]
  %8 = xla_tuple %s5, %s6, %s7
  %s9 = sld [smem:[#allocation0]]
  $region69: #{block_forward.3} parent=0
    _
  %s11 = ssub.s32 1, %s9
  %s12 = scalar_select 0, %s11, %s9
  loop: start=0, step=1, limit=4
  $region2: #{block_forward.3} parent=0 // loop_pre_header
    _
  $region3: #{block_forward.3} parent=0 // loop_header
    %s14 = sphi 0, %s18
    %p15 = scmp.ge.s32.totalorder %s14, 4
    %s21 = sphi 0, %s33
    %s22 = sphi 0, %s29
    %s23 = sphi 0, %s21
    %s24 = sphi 0, %s22
    %s25 = sphi 0, %s23
    %s26 = sphi 0, %s24
    %s38 = sphi 0, %s40
    %s41 = sphi 0, %s38
    %s42 = sphi 0, %s41
    %s58 = sphi 0, %s42
    %s62 = sphi 0, %s62
    %s64 = sphi 0, %s62
    %s65 = sphi 0, %s64
    %s79 = sphi 0, %s65
    %s83 = sphi 0, %s83
    %s85 = sphi 0, %s83
    %s86 = sphi 0, %s85
    %s100 = sphi 0, %s86
    %s104 = sphi 0, %s104
    %s106 = sphi 0, %s104
    %s107 = sphi 0, %s106
    %s121 = sphi 0, %s107
    %s125 = sphi 0, %s125
    %s127 = sphi 0, %s125
    %s128 = sphi 0, %s127
    %s142 = sphi 0, %s128
    %s150 = sphi 0, %s152
    %s153 = sphi 0, %s150
    %s154 = sphi 0, %s153
    %s170 = sphi 0, %s154
    %s178 = sphi 0, %s180
    %s181 = sphi 0, %s178
    %s182 = sphi 0, %s181
    %s198 = sphi 0, %s182
    %s206 = sphi 0, %s208
    %s209 = sphi 0, %s206
    %s210 = sphi 0, %s209
    %s226 = sphi 0, %s210
  $region4: #{block_forward.3} parent=0 // loop_header_branch
    %17 = sbr.rel (%p15) target = $region8
  $region5: #{block_forward.3} parent=0 // loop_body
    %s19 = ssub.s32 %s14, 1
    %s20 = ssub.s32 %s14, 2
    %s27 = sadd.s32 1, %s22
    %p28 = scmp.ge.s32.totalorder %s27, 1
    %s29 = scalar_select %p28, 0, %s27
    %s30 = sadd.s32 1, %s21
    %s31 = scalar_select %p28, %s30, %s21
    %p32 = scmp.ge.s32.totalorder %s31, 2
    %s33 = scalar_select %p32, 0, %s31
    %s34 = ssub.s32 %s21, %s33
    %s35 = ssub.s32 %s22, %s29
    %s36 = sor.u32 %s34, %s35
    %p37 = scmp.eq.s32.totalorder %s36, 0
    %s39 = sadd.s32 %s38, 1
    %s40 = scalar_select %p37, %s38, %s39
    %p43 = pneg %p37
    %p44 = scmp.eq.s32.totalorder %s14, 1
    %p45 = por %p43, %p44
    %p46 = scmp.ne.s32.totalorder %s38, %s41
    %p47 = scmp.eq.s32.totalorder %s14, 0
    %p48 = por %p46, %p47
    %p49 = scmp.ne.s32.totalorder %s38, %s41
    %p50 = scmp.eq.s32.totalorder %s19, 1
    %p51 = por %p49, %p50
    %p52 = scmp.ne.s32.totalorder %s41, %s42
    %p53 = scmp.eq.s32.totalorder %s19, 0
    %p54 = por %p52, %p53
    %p55 = scmp.ne.s32.totalorder %s41, %s42
    %p56 = scmp.eq.s32.totalorder %s20, 1
    %p57 = por %p55, %p56
    %p59 = scmp.ne.s32.totalorder %s42, %s58
    %p60 = scmp.eq.s32.totalorder %s20, 0
    %p61 = por %p59, %p60
    %s63 = sadd.s32 %s62, 1
    %p66 = scmp.eq.s32.totalorder %s14, 1
    %p67 = scmp.ne.s32.totalorder %s62, %s64
    %p68 = scmp.eq.s32.totalorder %s14, 0
    %p69 = por %p67, %p68
    %p70 = scmp.ne.s32.totalorder %s62, %s64
    %p71 = scmp.eq.s32.totalorder %s19, 1
    %p72 = por %p70, %p71
    %p73 = scmp.ne.s32.totalorder %s64, %s65
    %p74 = scmp.eq.s32.totalorder %s19, 0
    %p75 = por %p73, %p74
    %p76 = scmp.ne.s32.totalorder %s64, %s65
    %p77 = scmp.eq.s32.totalorder %s20, 1
    %p78 = por %p76, %p77
    %p80 = scmp.ne.s32.totalorder %s65, %s79
    %p81 = scmp.eq.s32.totalorder %s20, 0
    %p82 = por %p80, %p81
    %s84 = sadd.s32 %s83, 1
    %p87 = scmp.eq.s32.totalorder %s14, 1
    %p88 = scmp.ne.s32.totalorder %s83, %s85
    %p89 = scmp.eq.s32.totalorder %s14, 0
    %p90 = por %p88, %p89
    %p91 = scmp.ne.s32.totalorder %s83, %s85
    %p92 = scmp.eq.s32.totalorder %s19, 1
    %p93 = por %p91, %p92
    %p94 = scmp.ne.s32.totalorder %s85, %s86
    %p95 = scmp.eq.s32.totalorder %s19, 0
    %p96 = por %p94, %p95
    %p97 = scmp.ne.s32.totalorder %s85, %s86
    %p98 = scmp.eq.s32.totalorder %s20, 1
    %p99 = por %p97, %p98
    %p101 = scmp.ne.s32.totalorder %s86, %s100
    %p102 = scmp.eq.s32.totalorder %s20, 0
    %p103 = por %p101, %p102
    %s105 = sadd.s32 %s104, 1
    %p108 = scmp.eq.s32.totalorder %s14, 1
    %p109 = scmp.ne.s32.totalorder %s104, %s106
    %p110 = scmp.eq.s32.totalorder %s14, 0
    %p111 = por %p109, %p110
    %p112 = scmp.ne.s32.totalorder %s104, %s106
    %p113 = scmp.eq.s32.totalorder %s19, 1
    %p114 = por %p112, %p113
    %p115 = scmp.ne.s32.totalorder %s106, %s107
    %p116 = scmp.eq.s32.totalorder %s19, 0
    %p117 = por %p115, %p116
    %p118 = scmp.ne.s32.totalorder %s106, %s107
    %p119 = scmp.eq.s32.totalorder %s20, 1
    %p120 = por %p118, %p119
    %p122 = scmp.ne.s32.totalorder %s107, %s121
    %p123 = scmp.eq.s32.totalorder %s20, 0
    %p124 = por %p122, %p123
    %s126 = sadd.s32 %s125, 1
    %p129 = scmp.eq.s32.totalorder %s14, 1
    %p130 = scmp.ne.s32.totalorder %s125, %s127
    %p131 = scmp.eq.s32.totalorder %s14, 0
    %p132 = por %p130, %p131
    %p133 = scmp.ne.s32.totalorder %s125, %s127
    %p134 = scmp.eq.s32.totalorder %s19, 1
    %p135 = por %p133, %p134
    %p136 = scmp.ne.s32.totalorder %s127, %s128
    %p137 = scmp.eq.s32.totalorder %s19, 0
    %p138 = por %p136, %p137
    %p139 = scmp.ne.s32.totalorder %s127, %s128
    %p140 = scmp.eq.s32.totalorder %s20, 1
    %p141 = por %p139, %p140
    %p143 = scmp.ne.s32.totalorder %s128, %s142
    %p144 = scmp.eq.s32.totalorder %s20, 0
    %p145 = por %p143, %p144
    %s146 = ssub.s32 %s21, %s33
    %s147 = ssub.s32 %s22, %s29
    %s148 = sor.u32 %s146, %s147
    %p149 = scmp.eq.s32.totalorder %s148, 0
    %s151 = sadd.s32 %s150, 1
    %s152 = scalar_select %p149, %s150, %s151
    %p155 = pneg %p149
    %p156 = scmp.eq.s32.totalorder %s14, 1
    %p157 = por %p155, %p156
    %p158 = scmp.ne.s32.totalorder %s150, %s153
    %p159 = scmp.eq.s32.totalorder %s14, 0
    %p160 = por %p158, %p159
    %p161 = scmp.ne.s32.totalorder %s150, %s153
    %p162 = scmp.eq.s32.totalorder %s19, 1
    %p163 = por %p161, %p162
    %p164 = scmp.ne.s32.totalorder %s153, %s154
    %p165 = scmp.eq.s32.totalorder %s19, 0
    %p166 = por %p164, %p165
    %p167 = scmp.ne.s32.totalorder %s153, %s154
    %p168 = scmp.eq.s32.totalorder %s20, 1
    %p169 = por %p167, %p168
    %p171 = scmp.ne.s32.totalorder %s154, %s170
    %p172 = scmp.eq.s32.totalorder %s20, 0
    %p173 = por %p171, %p172
    %s174 = ssub.s32 %s21, %s33
    %s175 = ssub.s32 %s22, %s29
    %s176 = sor.u32 %s174, %s175
    %p177 = scmp.eq.s32.totalorder %s176, 0
    %s179 = sadd.s32 %s178, 1
    %s180 = scalar_select %p177, %s178, %s179
    %p183 = pneg %p177
    %p184 = scmp.eq.s32.totalorder %s14, 1
    %p185 = por %p183, %p184
    %p186 = scmp.ne.s32.totalorder %s178, %s181
    %p187 = scmp.eq.s32.totalorder %s14, 0
    %p188 = por %p186, %p187
    %p189 = scmp.ne.s32.totalorder %s178, %s181
    %p190 = scmp.eq.s32.totalorder %s19, 1
    %p191 = por %p189, %p190
    %p192 = scmp.ne.s32.totalorder %s181, %s182
    %p193 = scmp.eq.s32.totalorder %s19, 0
    %p194 = por %p192, %p193
    %p195 = scmp.ne.s32.totalorder %s181, %s182
    %p196 = scmp.eq.s32.totalorder %s20, 1
    %p197 = por %p195, %p196
    %p199 = scmp.ne.s32.totalorder %s182, %s198
    %p200 = scmp.eq.s32.totalorder %s20, 0
    %p201 = por %p199, %p200
    %s202 = ssub.s32 %s21, %s33
    %s203 = ssub.s32 %s22, %s29
    %s204 = sor.u32 %s202, %s203
    %p205 = scmp.eq.s32.totalorder %s204, 0
    %s207 = sadd.s32 %s206, 1
    %s208 = scalar_select %p205, %s206, %s207
    %p211 = pneg %p205
    %p212 = scmp.eq.s32.totalorder %s14, 1
    %p213 = por %p211, %p212
    %p214 = scmp.ne.s32.totalorder %s206, %s209
    %p215 = scmp.eq.s32.totalorder %s14, 0
    %p216 = por %p214, %p215
    %p217 = scmp.ne.s32.totalorder %s206, %s209
    %p218 = scmp.eq.s32.totalorder %s19, 1
    %p219 = por %p217, %p218
    %p220 = scmp.ne.s32.totalorder %s209, %s210
    %p221 = scmp.eq.s32.totalorder %s19, 0
    %p222 = por %p220, %p221
    %p223 = scmp.ne.s32.totalorder %s209, %s210
    %p224 = scmp.eq.s32.totalorder %s20, 1
    %p225 = por %p223, %p224
    %p227 = scmp.ne.s32.totalorder %s210, %s226
    %p228 = scmp.eq.s32.totalorder %s20, 0
    %p229 = por %p227, %p228
    %p230 = scmp.le.s32.totalorder 1, %s14
    %p231 = scmp.lt.s32.totalorder %s14, 3
    %p232 = pnand %p230, %p231
    %p233 = pneg %p232
    // Predicated region
    $region9: #{block_forward.3} parent=5 // pred_check
      _
    $region10: #{block_forward.3} parent=5 // pred_check_branch
      %235 = sbr.rel (%p232) target = $region12
    $region11: #{block_forward.3} parent=5 // pred_region
      %s236 = ssub.s32 %s14, 1
      // Predicated region
      $region13: #{block_forward.3} parent=11 // pred_check
        %p237 = pneg %p75
      $region14: #{block_forward.3} parent=11 // pred_check_branch
        %239 = sbr.rel (%p237) target = $region16
      $region15: #{block_forward.3} parent=11 // pred_region
        _
      $region16: #{block_forward.3} parent=11 // pred_fallthru
        _
      // Predicated region
      $region17: #{block_forward.3} parent=11 // pred_check
        %p240 = pneg %p96
      $region18: #{block_forward.3} parent=11 // pred_check_branch
        %242 = sbr.rel (%p240) target = $region20
      $region19: #{block_forward.3} parent=11 // pred_region
        _
      $region20: #{block_forward.3} parent=11 // pred_fallthru
        _
      // Predicated region
      $region21: #{block_forward.3} parent=11 // pred_check
        %p243 = pneg %p117
      $region22: #{block_forward.3} parent=11 // pred_check_branch
        %245 = sbr.rel (%p243) target = $region24
      $region23: #{block_forward.3} parent=11 // pred_region
        _
      $region24: #{block_forward.3} parent=11 // pred_fallthru
        _
      // Predicated region
      $region25: #{block_forward.3} parent=11 // pred_check
        %p246 = pneg %p138
      $region26: #{block_forward.3} parent=11 // pred_check_branch
        %248 = sbr.rel (%p246) target = $region28
      $region27: #{block_forward.3} parent=11 // pred_region
        _
      $region28: #{block_forward.3} parent=11 // pred_fallthru
        _
    $region12: #{block_forward.3} parent=5 // pred_fallthru
      _
    %p249 = scmp.lt.s32.totalorder %s14, 2
    // Predicated region
    $region29: #{block_forward.3} parent=5 // pred_check
      %p250 = pneg %p249
    $region30: #{block_forward.3} parent=5 // pred_check_branch
      %252 = sbr.rel (%p250) target = $region32
    $region31: #{block_forward.3} parent=5 // pred_region
      // Predicated region
      $region33: #{block_forward.3} parent=31 // pred_check
        %p253 = pneg %p48
      $region34: #{block_forward.3} parent=31 // pred_check_branch
        %255 = sbr.rel (%p253) target = $region36
      $region35: #{block_forward.3} parent=31 // pred_region
        %p256 = scmp.lt.s32.totalorder %s21, 1
        %s257 = scalar_select %p256, %s21, 1
        %p258 = scmp.lt.s32.totalorder %s22, 0
        %s259 = scalar_select %p258, %s22, 0
        %s260 = sadd.s32 %s259, %s257
        %s261 = smul.addr %s260, 8
        %s262 = scalar_lea.vmem %s0, %s261
      $region36: #{block_forward.3} parent=31 // pred_fallthru
        _
    $region32: #{block_forward.3} parent=5 // pred_fallthru
      _
    %p263 = scmp.le.s32.totalorder 1, %s14
    %p264 = scmp.lt.s32.totalorder %s14, 3
    %p265 = pnand %p263, %p264
    %p266 = pneg %p265
    // Predicated region
    $region37: #{block_forward.3} parent=5 // pred_check
      _
    $region38: #{block_forward.3} parent=5 // pred_check_branch
      %268 = sbr.rel (%p265) target = $region40
    $region39: #{block_forward.3} parent=5 // pred_region
      %s269 = ssub.s32 %s14, 1
      %p270 = scmp.lt.s32.totalorder %s23, 1
      %s271 = scalar_select %p270, %s23, 1
      %p272 = scmp.lt.s32.totalorder %s24, 0
      %s273 = scalar_select %p272, %s24, 0
      %s274 = sadd.s32 %s273, %s271
      %s275 = smul.addr %s274, 8
      %s276 = scalar_lea.vmem %s0, %s275
      %p277 = pneg %p54
      %p278 = pneg %p51
      %p279 = pneg %p75
      %p280 = pneg %p72
      %p281 = pneg %p96
      %p282 = pneg %p93
      %p283 = pneg %p117
      %p284 = pneg %p114
      %p285 = pneg %p138
      %p286 = pneg %p135
      %p287 = pneg %p166
      %p288 = pneg %p163
      %p289 = scmp.lt.s32.totalorder %s23, 1
      %s290 = scalar_select %p289, %s23, 1
      %p291 = scmp.lt.s32.totalorder %s24, 0
      %s292 = scalar_select %p291, %s24, 0
      %s293 = smul.addr %s290, 4
      %s294 = sadd.s32 %s292, %s293
      %s295 = smul.addr %s294, 4
      %s296 = scalar_lea.vmem %s5, %s295
      %p297 = pneg %p194
      %p298 = pneg %p191
      %p299 = scmp.lt.s32.totalorder %s23, 1
      %s300 = scalar_select %p299, %s23, 1
      %p301 = scmp.lt.s32.totalorder %s24, 0
      %s302 = scalar_select %p301, %s24, 0
      %s303 = smul.addr %s300, 4
      %s304 = sadd.s32 %s302, %s303
      %s305 = smul.addr %s304, 4
      %s306 = scalar_lea.vmem %s6, %s305
      %p307 = pneg %p222
      %p308 = pneg %p219
      %p309 = scmp.lt.s32.totalorder %s23, 1
      %s310 = scalar_select %p309, %s23, 1
      %p311 = scmp.lt.s32.totalorder %s24, 0
      %s312 = scalar_select %p311, %s24, 0
      %s313 = smul.addr %s310, 4
      %s314 = sadd.s32 %s312, %s313
      %s315 = smul.addr %s314, 4
      %s316 = scalar_lea.vmem %s7, %s315
      %p317 = scmp.lt.s32.totalorder %s23, 1
      %s318 = scalar_select %p317, %s23, 1
      %p319 = scmp.lt.s32.totalorder %s24, 0
      %s320 = scalar_select %p319, %s24, 0
      %s321 = sadd.s32 %s320, %s318
      %s322 = smul.addr %s321, 8
      %s323 = scalar_lea.vmem %s0, %s322
      %p324 = scmp.lt.s32.totalorder %s23, 1
      %s325 = scalar_select %p324, %s23, 1
      %p326 = scmp.lt.s32.totalorder %s24, 0
      %s327 = scalar_select %p326, %s24, 0
      %s328 = smul.addr %s325, 4
      %s329 = sadd.s32 %s327, %s328
      %s330 = smul.addr %s329, 4
      %s331 = scalar_lea.vmem %s5, %s330
      %p332 = scmp.lt.s32.totalorder %s23, 1
      %s333 = scalar_select %p332, %s23, 1
      %p334 = scmp.lt.s32.totalorder %s24, 0
      %s335 = scalar_select %p334, %s24, 0
      %s336 = smul.addr %s333, 4
      %s337 = sadd.s32 %s335, %s336
      %s338 = smul.addr %s337, 4
      %s339 = scalar_lea.vmem %s6, %s338
      %p340 = scmp.lt.s32.totalorder %s23, 1
      %s341 = scalar_select %p340, %s23, 1
      %p342 = scmp.lt.s32.totalorder %s24, 0
      %s343 = scalar_select %p342, %s24, 0
      %s344 = smul.addr %s341, 4
      %s345 = sadd.s32 %s343, %s344
      %s346 = smul.addr %s345, 4
      %s347 = scalar_lea.vmem %s7, %s346
      %v349 = vld [vmem:[%s323] sm:$0xff]
      %v350 = vld [vmem:[%s1] sm:$0x1]
      %v351 = vld [vmem:[%s2] sm:$0x1]
      %vm352 = vcmask 261120
      %v353 = vsel %vm352, %v349, 0.0
      %354 = vadd.xlane.f32.xlu0 %v353
      %v355 = vpop.xlane.xlu0 %354
      %v356 = vrcp.pop 32.0
      %v357 = vmul.f32 %v355, %v356
      %v358 = vsub.f32 %v349, %v357
      %v359 = vmul.f32 %v358, %v358
      %v360 = vsel %vm352, %v359, 0.0
      %361 = vadd.xlane.f32.xlu0 %v360
      %v362 = vpop.xlane.xlu0 %361
      %v363 = vmul.f32 %v362, 0.032258064
      %v364 = vrsqrt.pop %v363
      %v365 = vmul.f32 %v363, %v364
      %vm366 = vcmp.eq.f32.partialorder %v363, inf
      %v367 = vsel %vm366, %v363, %v365
      %vm368 = vcmp.eq.f32.partialorder %v363, 0.0
      %v369 = vand.u32 %v363, 2147483648
      %v370 = vsel %vm368, %v369, %v367
      %v372 = vlaneseq
      %v373 = vshrl.u32 %v372, 7
      %v374 = vsub.s32 0, %v373
      %v375 = vrot.slane %v350, %v374
      %v377 = vmul.f32 %v375, %v358
      %v378 = vadd.f32 %v370, 1e-06
      %v379 = vrcp.pop %v378
      %v380 = vmul.f32 %v377, %v379
      %v382 = vlaneseq
      %v383 = vshrl.u32 %v382, 7
      %v384 = vsub.s32 0, %v383
      %v385 = vrot.slane %v351, %v384
      %v387 = vadd.f32 %v380, %v385
      %v388 = vpack.c.bf16 %v387, %v387
      %v389 = vld [vmem:[%s3] sm:$0xf]
      %v390 = vld [vmem:[%s3 + $0x4] sm:$0xf]
      %v391 = vld [vmem:[%s3 + $0x8] sm:$0xf]
      %v392 = vld [vmem:[%s3 + $0xc] sm:$0xf]
      %v393 = vld [vmem:[%s4] sm:$0x1]
      %v395 = vlaneseq
      %v396 = vshrl.u32 %v395, 7
      %v397 = vsub.s32 0, %v396
      %v398 = vrot.slane %v393, %v397
      %v404 = vunpack.c.l.b16 %v389
      %v405 = vunpack.c.l.b16 %v390
      %v406 = vunpack.c.l.b16 %v391
      %v407 = vunpack.c.l.b16 %v392
      %v408 = vpack.c.b16 %v405, %v404
      %v409 = vpack.c.b16 %v407, %v406
      %v413 = vsel %vm352, %v388, 0
      %415 = vmatprep.subr.bf16.mxu0 0
      %416 = vmatpush1.bf16.msra.mxu0 0
      %417 = vmatprep.subr.bf16.mxu0 0
      %418 = vmatpush1.bf16.msra.mxu0 0
      %419 = vmatprep.subr.bf16.mxu0 0
      %420 = vmatpush1.bf16.msra.mxu0 0
      %421 = vmatprep.subr.bf16.mxu0 0
      %422 = vmatpush1.bf16.msra.mxu0 0
      %423 = vmatprep.subr.bf16.mxu0 0
      %424 = vmatpush1.bf16.msra.mxu0 0
      %425 = vmatprep.subr.bf16.mxu0 0
      %426 = vmatpush1.bf16.msra.mxu0 0
      %427 = vmatprep.subr.bf16.mxu0 0
      %428 = vmatpush1.bf16.msra.mxu0 %v409
      %429 = vmatprep.subr.bf16.mxu0 0
      %430 = vmatpush1.bf16.msra.mxu0 %v408
      %431 = vmatprep.subr.bf16.mxu0 0
      %432 = vmatpush2.bf16.msra.mxu0 0
      %433 = vmatprep.subr.bf16.mxu0 0
      %434 = vmatpush2.bf16.msra.mxu0 0
      %435 = vmatprep.subr.bf16.mxu0 0
      %436 = vmatpush2.bf16.msra.mxu0 0
      %437 = vmatprep.subr.bf16.mxu0 0
      %438 = vmatpush2.bf16.msra.mxu0 0
      %439 = vmatprep.subr.bf16.mxu0 0
      %440 = vmatpush2.bf16.msra.mxu0 0
      %441 = vmatprep.subr.bf16.mxu0 0
      %442 = vmatpush2.bf16.msra.mxu0 0
      %443 = vmatprep.subr.bf16.mxu0 0
      %444 = vmatpush2.bf16.msra.mxu0 0
      %445 = vmatprep.subr.bf16.mxu0 0
      %446 = vmatpush2.bf16.msra.mxu0 0
      %447 = vmatprep.mubr.bf16.mxu0 0
      %448 = vmatmul.mubr.bf16.gmra.mxu0 %v413
      %v449 = vpop.f32.mrf.mxu0
      %v450 = vadd.f32 %v398, %v449
      %v451 = vpop.f32.mrf.mxu0
      %v452 = vpop.f32.mrf.mxu0
      %v453 = vpop.f32.mrf.mxu0
      %454 = vdwg.mxu0
      %v455 = vpack.c.bf16 %v450, %v450
      %vm456 = vcmask 60416
      %457 = vst.msk [vmem:[%s331] sm:$0xf] %vm456, %v455
      %v459 = vunpack.c.l.b16 %v455
      %v460 = vpack.c.b16 %v459, %v459
      %461 = vrot.lane.b32.xlu0 %v460, 96
      %v462 = vpop.permute.xlu0 %461
      %464 = vst.msk [vmem:[%s339] sm:$0xf] %vm456, %v462
      %465 = vrot.lane.b32.xlu0 %v460, 64
      %v466 = vpop.permute.xlu0 %465
      %468 = vst.msk [vmem:[%s347] sm:$0xf] %vm456, %v466
      %469 = vrot.lane.b32.xlu0 %v460, 120
      %v470 = vpop.permute.xlu0 %469
      %s472 = scalar_lea.vmem %s331, 4
      %473 = vst.msk [vmem:[%s472] sm:$0xf] %vm456, %v470
      %474 = vrot.lane.b32.xlu0 %v460, 88
      %v475 = vpop.permute.xlu0 %474
      %s477 = scalar_lea.vmem %s339, 4
      %478 = vst.msk [vmem:[%s477] sm:$0xf] %vm456, %v475
      %479 = vrot.lane.b32.xlu0 %v460, 56
      %v480 = vpop.permute.xlu0 %479
      %s482 = scalar_lea.vmem %s347, 4
      %483 = vst.msk [vmem:[%s482] sm:$0xf] %vm456, %v480
      %484 = vrot.lane.b32.xlu0 %v460, 112
      %v485 = vpop.permute.xlu0 %484
      %s487 = scalar_lea.vmem %s331, 8
      %488 = vst.msk [vmem:[%s487] sm:$0xf] %vm456, %v485
      %489 = vrot.lane.b32.xlu0 %v460, 80
      %v490 = vpop.permute.xlu0 %489
      %s492 = scalar_lea.vmem %s339, 8
      %493 = vst.msk [vmem:[%s492] sm:$0xf] %vm456, %v490
      %494 = vrot.lane.b32.xlu0 %v460, 48
      %v495 = vpop.permute.xlu0 %494
      %s497 = scalar_lea.vmem %s347, 8
      %498 = vst.msk [vmem:[%s497] sm:$0xf] %vm456, %v495
      %499 = vrot.lane.b32.xlu0 %v460, 104
      %v500 = vpop.permute.xlu0 %499
      %s502 = scalar_lea.vmem %s331, 12
      %503 = vst.msk [vmem:[%s502] sm:$0xf] %vm456, %v500
      %504 = vrot.lane.b32.xlu0 %v460, 72
      %v505 = vpop.permute.xlu0 %504
      %s507 = scalar_lea.vmem %s339, 12
      %508 = vst.msk [vmem:[%s507] sm:$0xf] %vm456, %v505
      %509 = vrot.lane.b32.xlu0 %v460, 40
      %v510 = vpop.permute.xlu0 %509
      %s512 = scalar_lea.vmem %s347, 12
      %513 = vst.msk [vmem:[%s512] sm:$0xf] %vm456, %v510
      %p514 = scmp.lt.s32.totalorder %s23, 1
      %s515 = scalar_select %p514, %s23, 1
      %p516 = scmp.lt.s32.totalorder %s24, 0
      %s517 = scalar_select %p516, %s24, 0
      %s518 = smul.addr %s515, 4
      %s519 = sadd.s32 %s517, %s518
      %s520 = smul.addr %s519, 4
      %s521 = scalar_lea.vmem %s5, %s520
      %p522 = scmp.lt.s32.totalorder %s23, 1
      %s523 = scalar_select %p522, %s23, 1
      %p524 = scmp.lt.s32.totalorder %s24, 0
      %s525 = scalar_select %p524, %s24, 0
      %s526 = smul.addr %s523, 4
      %s527 = sadd.s32 %s525, %s526
      %s528 = smul.addr %s527, 4
      %s529 = scalar_lea.vmem %s6, %s528
      %p530 = scmp.lt.s32.totalorder %s23, 1
      %s531 = scalar_select %p530, %s23, 1
      %p532 = scmp.lt.s32.totalorder %s24, 0
      %s533 = scalar_select %p532, %s24, 0
      %s534 = smul.addr %s531, 4
      %s535 = sadd.s32 %s533, %s534
      %s536 = smul.addr %s535, 4
      %s537 = scalar_lea.vmem %s7, %s536
      // Predicated region
      $region41: #{block_forward.3} parent=39 // pred_check
        %p538 = pneg %p163
      $region42: #{block_forward.3} parent=39 // pred_check_branch
        %540 = sbr.rel (%p538) target = $region44
      $region43: #{block_forward.3} parent=39 // pred_region
        _
      $region44: #{block_forward.3} parent=39 // pred_fallthru
        _
      // Predicated region
      $region45: #{block_forward.3} parent=39 // pred_check
        %p541 = pneg %p191
      $region46: #{block_forward.3} parent=39 // pred_check_branch
        %543 = sbr.rel (%p541) target = $region48
      $region47: #{block_forward.3} parent=39 // pred_region
        _
      $region48: #{block_forward.3} parent=39 // pred_fallthru
        _
      // Predicated region
      $region49: #{block_forward.3} parent=39 // pred_check
        %p544 = pneg %p219
      $region50: #{block_forward.3} parent=39 // pred_check_branch
        %546 = sbr.rel (%p544) target = $region52
      $region51: #{block_forward.3} parent=39 // pred_region
        _
      $region52: #{block_forward.3} parent=39 // pred_fallthru
        _
    $region40: #{block_forward.3} parent=5 // pred_fallthru
      _
    %p547 = scmp.le.s32.totalorder 2, %s14
    // Predicated region
    $region53: #{block_forward.3} parent=5 // pred_check
      %p548 = pneg %p547
    $region54: #{block_forward.3} parent=5 // pred_check_branch
      %550 = sbr.rel (%p548) target = $region56
    $region55: #{block_forward.3} parent=5 // pred_region
      %s551 = ssub.s32 %s14, 2
      // Predicated region
      $region57: #{block_forward.3} parent=55 // pred_check
        %p552 = pneg %p169
      $region58: #{block_forward.3} parent=55 // pred_check_branch
        %554 = sbr.rel (%p552) target = $region60
      $region59: #{block_forward.3} parent=55 // pred_region
        %p555 = scmp.lt.s32.totalorder %s25, 1
        %s556 = scalar_select %p555, %s25, 1
        %p557 = scmp.lt.s32.totalorder %s26, 0
        %s558 = scalar_select %p557, %s26, 0
        %s559 = smul.addr %s556, 4
        %s560 = sadd.s32 %s558, %s559
        %s561 = smul.addr %s560, 4
        %s562 = scalar_lea.vmem %s5, %s561
      $region60: #{block_forward.3} parent=55 // pred_fallthru
        _
      // Predicated region
      $region61: #{block_forward.3} parent=55 // pred_check
        %p563 = pneg %p197
      $region62: #{block_forward.3} parent=55 // pred_check_branch
        %565 = sbr.rel (%p563) target = $region64
      $region63: #{block_forward.3} parent=55 // pred_region
        %p566 = scmp.lt.s32.totalorder %s25, 1
        %s567 = scalar_select %p566, %s25, 1
        %p568 = scmp.lt.s32.totalorder %s26, 0
        %s569 = scalar_select %p568, %s26, 0
        %s570 = smul.addr %s567, 4
        %s571 = sadd.s32 %s569, %s570
        %s572 = smul.addr %s571, 4
        %s573 = scalar_lea.vmem %s6, %s572
      $region64: #{block_forward.3} parent=55 // pred_fallthru
        _
      // Predicated region
      $region65: #{block_forward.3} parent=55 // pred_check
        %p574 = pneg %p225
      $region66: #{block_forward.3} parent=55 // pred_check_branch
        %576 = sbr.rel (%p574) target = $region68
      $region67: #{block_forward.3} parent=55 // pred_region
        %p577 = scmp.lt.s32.totalorder %s25, 1
        %s578 = scalar_select %p577, %s25, 1
        %p579 = scmp.lt.s32.totalorder %s26, 0
        %s580 = scalar_select %p579, %s26, 0
        %s581 = smul.addr %s578, 4
        %s582 = sadd.s32 %s580, %s581
        %s583 = smul.addr %s582, 4
        %s584 = scalar_lea.vmem %s7, %s583
      $region68: #{block_forward.3} parent=55 // pred_fallthru
        _
    $region56: #{block_forward.3} parent=5 // pred_fallthru
      _
  $region6: #{block_forward.3} parent=0 // loop_footer
    %s18 = sadd.s32 1, %s14
  $region7: #{block_forward.3} parent=0 // loop_footer_branch
    %13 = sbr.rel target = $region3
  $region8: #{block_forward.3} parent=0 // loop_exit
    _

// kernel: block_forward.5
$region0: #{block_forward.5}
  #allocation0 [shape = 'u32[]', space=smem, size = 0x4, offset = 0x4, fixed_abs, tag = 'smem constant byte address 0x4 - core index']
  #allocation1 [shape = 'u32[144,128]{1,0:T(1,128)}', space=vmem, size = 0x12000, scoped, tag = 'internal scratch']
  #allocation2 [shape = 'f32[8,32]{1,0:T(8,128)}', space=vmem, size = 0x1000, scoped, tag = 'scratch operand']
  #allocation3 [shape = 'bf16[8,32]{1,0:T(8,128)(2,1)}', space=vmem, size = 0x800, scoped, tag = 'scratch operand']
  #allocation4 [shape = 'f32[8,32]{1,0:T(8,128)}', space=vmem, size = 0x1000, scoped, tag = 'scratch operand']
  %s0 = inlined_call_operand.vmem [shape: f32[2,8,32], index: 0, kind: input, shape index: {}]
  %s1 = inlined_call_operand.vmem [shape: bf16[2,8,32], index: 1, kind: input, shape index: {}]
  %s2 = inlined_call_operand.vmem [shape: bf16[32,32], index: 2, kind: input, shape index: {}]
  %s3 = inlined_call_operand.vmem [shape: f32[1,32], index: 3, kind: input, shape index: {}]
  %s4 = inlined_call_operand.vmem [shape: f32[1,32], index: 4, kind: input, shape index: {}]
  %s5 = inlined_call_operand.vmem [shape: f32[1,32], index: 5, kind: input, shape index: {}]
  %s6 = inlined_call_operand.vmem [shape: bf16[32,64], index: 6, kind: input, shape index: {}]
  %s7 = inlined_call_operand.vmem [shape: f32[1,64], index: 7, kind: input, shape index: {}]
  %s8 = inlined_call_operand.vmem [shape: bf16[64,32], index: 8, kind: input, shape index: {}]
  %s9 = inlined_call_operand.vmem [shape: f32[1,32], index: 9, kind: input, shape index: {}]
  %s10 = inlined_call_operand.hbm [shape: f32[2,8,32], index: 10, kind: output, shape index: {}]
  %s11 = sld [smem:[#allocation0]]
  $region81: #{block_forward.5} parent=0
    _
  %s13 = ssub.s32 1, %s11
  %s14 = scalar_select 0, %s13, %s11
  $region1: #{block_forward.5} parent=0
    #allocation5 [shape = 'u8[8192]{0}', space=vmem, size = 0x2000, scoped, tag = 'output window, operand 0']
    #allocation6 [shape = 's32[2]{0}', space=sflag, size = 0x8, scoped, tag = 'scoped memory for block_forward.5']
    %15 = vsyncpa [#allocation6], 0
    %s16 = scalar_lea.sflag [#allocation6], 1
    %17 = vsyncpa %s16, 0
    loop: start=0, step=1, limit=4
    $region2: #{block_forward.5} parent=1 // loop_pre_header
      _
    $region3: #{block_forward.5} parent=1 // loop_header
      %s19 = sphi 0, %s23
      %p20 = scmp.ge.s32.totalorder %s19, 4
      %s26 = sphi 0, %s45
      %s27 = sphi 0, %s41
      %s28 = sphi 0, %s37
      %s29 = sphi 0, %s26
      %s30 = sphi 0, %s27
      %s31 = sphi 0, %s28
      %s32 = sphi 0, %s29
      %s33 = sphi 0, %s30
      %s34 = sphi 0, %s31
      %s50 = sphi 0, %s52
      %s53 = sphi 0, %s50
      %s54 = sphi 0, %s53
      %s70 = sphi 0, %s54
      %s78 = sphi 0, %s80
      %s81 = sphi 0, %s78
      %s82 = sphi 0, %s81
      %s98 = sphi 0, %s82
      %s102 = sphi 0, %s102
      %s104 = sphi 0, %s102
      %s105 = sphi 0, %s104
      %s119 = sphi 0, %s105
      %s123 = sphi 0, %s123
      %s125 = sphi 0, %s123
      %s126 = sphi 0, %s125
      %s140 = sphi 0, %s126
      %s144 = sphi 0, %s144
      %s146 = sphi 0, %s144
      %s147 = sphi 0, %s146
      %s161 = sphi 0, %s147
      %s165 = sphi 0, %s165
      %s167 = sphi 0, %s165
      %s168 = sphi 0, %s167
      %s182 = sphi 0, %s168
      %s188 = sphi 0, %s190
      %s191 = sphi 0, %s188
      %s192 = sphi 0, %s191
      %s208 = sphi 0, %s192
      %s214 = sphi 0, %s216
      %s217 = sphi 0, %s214
      %s218 = sphi 0, %s217
      %s234 = sphi 0, %s218
      %s240 = sphi 0, %s242
      %s243 = sphi 0, %s240
      %s244 = sphi 0, %s243
      %s260 = sphi 0, %s244
      %s264 = sphi 0, %s264
      %s266 = sphi 0, %s264
      %s267 = sphi 0, %s266
      %s281 = sphi 0, %s267
      %s289 = sphi 0, %s291
      %s292 = sphi 0, %s289
      %s293 = sphi 0, %s292
      %s309 = sphi 0, %s293
    $region4: #{block_forward.5} parent=1 // loop_header_branch
      %22 = sbr.rel (%p20) target = $region8
    $region5: #{block_forward.5} parent=1 // loop_body
      %s24 = ssub.s32 %s19, 1
      %s25 = ssub.s32 %s19, 2
      %s35 = sadd.s32 1, %s28
      %p36 = scmp.ge.s32.totalorder %s35, 1
      %s37 = scalar_select %p36, 0, %s35
      %s38 = sadd.s32 1, %s27
      %s39 = scalar_select %p36, %s38, %s27
      %p40 = scmp.ge.s32.totalorder %s39, 1
      %s41 = scalar_select %p40, 0, %s39
      %s42 = sadd.s32 1, %s26
      %s43 = scalar_select %p40, %s42, %s26
      %p44 = scmp.ge.s32.totalorder %s43, 2
      %s45 = scalar_select %p44, 0, %s43
      %s46 = ssub.s32 %s26, %s45
      %s47 = ssub.s32 %s27, %s41
      %s48 = sor.u32 %s46, %s47
      %p49 = scmp.eq.s32.totalorder %s48, 0
      %s51 = sadd.s32 %s50, 1
      %s52 = scalar_select %p49, %s50, %s51
      %p55 = pneg %p49
      %p56 = scmp.eq.s32.totalorder %s19, 1
      %p57 = por %p55, %p56
      %p58 = scmp.ne.s32.totalorder %s50, %s53
      %p59 = scmp.eq.s32.totalorder %s19, 0
      %p60 = por %p58, %p59
      %p61 = scmp.ne.s32.totalorder %s50, %s53
      %p62 = scmp.eq.s32.totalorder %s24, 1
      %p63 = por %p61, %p62
      %p64 = scmp.ne.s32.totalorder %s53, %s54
      %p65 = scmp.eq.s32.totalorder %s24, 0
      %p66 = por %p64, %p65
      %p67 = scmp.ne.s32.totalorder %s53, %s54
      %p68 = scmp.eq.s32.totalorder %s25, 1
      %p69 = por %p67, %p68
      %p71 = scmp.ne.s32.totalorder %s54, %s70
      %p72 = scmp.eq.s32.totalorder %s25, 0
      %p73 = por %p71, %p72
      %s74 = ssub.s32 %s26, %s45
      %s75 = ssub.s32 %s27, %s41
      %s76 = sor.u32 %s74, %s75
      %p77 = scmp.eq.s32.totalorder %s76, 0
      %s79 = sadd.s32 %s78, 1
      %s80 = scalar_select %p77, %s78, %s79
      %p83 = pneg %p77
      %p84 = scmp.eq.s32.totalorder %s19, 1
      %p85 = por %p83, %p84
      %p86 = scmp.ne.s32.totalorder %s78, %s81
      %p87 = scmp.eq.s32.totalorder %s19, 0
      %p88 = por %p86, %p87
      %p89 = scmp.ne.s32.totalorder %s78, %s81
      %p90 = scmp.eq.s32.totalorder %s24, 1
      %p91 = por %p89, %p90
      %p92 = scmp.ne.s32.totalorder %s81, %s82
      %p93 = scmp.eq.s32.totalorder %s24, 0
      %p94 = por %p92, %p93
      %p95 = scmp.ne.s32.totalorder %s81, %s82
      %p96 = scmp.eq.s32.totalorder %s25, 1
      %p97 = por %p95, %p96
      %p99 = scmp.ne.s32.totalorder %s82, %s98
      %p100 = scmp.eq.s32.totalorder %s25, 0
      %p101 = por %p99, %p100
      %s103 = sadd.s32 %s102, 1
      %p106 = scmp.eq.s32.totalorder %s19, 1
      %p107 = scmp.ne.s32.totalorder %s102, %s104
      %p108 = scmp.eq.s32.totalorder %s19, 0
      %p109 = por %p107, %p108
      %p110 = scmp.ne.s32.totalorder %s102, %s104
      %p111 = scmp.eq.s32.totalorder %s24, 1
      %p112 = por %p110, %p111
      %p113 = scmp.ne.s32.totalorder %s104, %s105
      %p114 = scmp.eq.s32.totalorder %s24, 0
      %p115 = por %p113, %p114
      %p116 = scmp.ne.s32.totalorder %s104, %s105
      %p117 = scmp.eq.s32.totalorder %s25, 1
      %p118 = por %p116, %p117
      %p120 = scmp.ne.s32.totalorder %s105, %s119
      %p121 = scmp.eq.s32.totalorder %s25, 0
      %p122 = por %p120, %p121
      %s124 = sadd.s32 %s123, 1
      %p127 = scmp.eq.s32.totalorder %s19, 1
      %p128 = scmp.ne.s32.totalorder %s123, %s125
      %p129 = scmp.eq.s32.totalorder %s19, 0
      %p130 = por %p128, %p129
      %p131 = scmp.ne.s32.totalorder %s123, %s125
      %p132 = scmp.eq.s32.totalorder %s24, 1
      %p133 = por %p131, %p132
      %p134 = scmp.ne.s32.totalorder %s125, %s126
      %p135 = scmp.eq.s32.totalorder %s24, 0
      %p136 = por %p134, %p135
      %p137 = scmp.ne.s32.totalorder %s125, %s126
      %p138 = scmp.eq.s32.totalorder %s25, 1
      %p139 = por %p137, %p138
      %p141 = scmp.ne.s32.totalorder %s126, %s140
      %p142 = scmp.eq.s32.totalorder %s25, 0
      %p143 = por %p141, %p142
      %s145 = sadd.s32 %s144, 1
      %p148 = scmp.eq.s32.totalorder %s19, 1
      %p149 = scmp.ne.s32.totalorder %s144, %s146
      %p150 = scmp.eq.s32.totalorder %s19, 0
      %p151 = por %p149, %p150
      %p152 = scmp.ne.s32.totalorder %s144, %s146
      %p153 = scmp.eq.s32.totalorder %s24, 1
      %p154 = por %p152, %p153
      %p155 = scmp.ne.s32.totalorder %s146, %s147
      %p156 = scmp.eq.s32.totalorder %s24, 0
      %p157 = por %p155, %p156
      %p158 = scmp.ne.s32.totalorder %s146, %s147
      %p159 = scmp.eq.s32.totalorder %s25, 1
      %p160 = por %p158, %p159
      %p162 = scmp.ne.s32.totalorder %s147, %s161
      %p163 = scmp.eq.s32.totalorder %s25, 0
      %p164 = por %p162, %p163
      %s166 = sadd.s32 %s165, 1
      %p169 = scmp.eq.s32.totalorder %s19, 1
      %p170 = scmp.ne.s32.totalorder %s165, %s167
      %p171 = scmp.eq.s32.totalorder %s19, 0
      %p172 = por %p170, %p171
      %p173 = scmp.ne.s32.totalorder %s165, %s167
      %p174 = scmp.eq.s32.totalorder %s24, 1
      %p175 = por %p173, %p174
      %p176 = scmp.ne.s32.totalorder %s167, %s168
      %p177 = scmp.eq.s32.totalorder %s24, 0
      %p178 = por %p176, %p177
      %p179 = scmp.ne.s32.totalorder %s167, %s168
      %p180 = scmp.eq.s32.totalorder %s25, 1
      %p181 = por %p179, %p180
      %p183 = scmp.ne.s32.totalorder %s168, %s182
      %p184 = scmp.eq.s32.totalorder %s25, 0
      %p185 = por %p183, %p184
      %s186 = ssub.s32 %s28, %s37
      %p187 = scmp.eq.s32.totalorder %s186, 0
      %s189 = sadd.s32 %s188, 1
      %s190 = scalar_select %p187, %s188, %s189
      %p193 = pneg %p187
      %p194 = scmp.eq.s32.totalorder %s19, 1
      %p195 = por %p193, %p194
      %p196 = scmp.ne.s32.totalorder %s188, %s191
      %p197 = scmp.eq.s32.totalorder %s19, 0
      %p198 = por %p196, %p197
      %p199 = scmp.ne.s32.totalorder %s188, %s191
      %p200 = scmp.eq.s32.totalorder %s24, 1
      %p201 = por %p199, %p200
      %p202 = scmp.ne.s32.totalorder %s191, %s192
      %p203 = scmp.eq.s32.totalorder %s24, 0
      %p204 = por %p202, %p203
      %p205 = scmp.ne.s32.totalorder %s191, %s192
      %p206 = scmp.eq.s32.totalorder %s25, 1
      %p207 = por %p205, %p206
      %p209 = scmp.ne.s32.totalorder %s192, %s208
      %p210 = scmp.eq.s32.totalorder %s25, 0
      %p211 = por %p209, %p210
      %s212 = ssub.s32 %s28, %s37
      %p213 = scmp.eq.s32.totalorder %s212, 0
      %s215 = sadd.s32 %s214, 1
      %s216 = scalar_select %p213, %s214, %s215
      %p219 = pneg %p213
      %p220 = scmp.eq.s32.totalorder %s19, 1
      %p221 = por %p219, %p220
      %p222 = scmp.ne.s32.totalorder %s214, %s217
      %p223 = scmp.eq.s32.totalorder %s19, 0
      %p224 = por %p222, %p223
      %p225 = scmp.ne.s32.totalorder %s214, %s217
      %p226 = scmp.eq.s32.totalorder %s24, 1
      %p227 = por %p225, %p226
      %p228 = scmp.ne.s32.totalorder %s217, %s218
      %p229 = scmp.eq.s32.totalorder %s24, 0
      %p230 = por %p228, %p229
      %p231 = scmp.ne.s32.totalorder %s217, %s218
      %p232 = scmp.eq.s32.totalorder %s25, 1
      %p233 = por %p231, %p232
      %p235 = scmp.ne.s32.totalorder %s218, %s234
      %p236 = scmp.eq.s32.totalorder %s25, 0
      %p237 = por %p235, %p236
      %s238 = ssub.s32 %s28, %s37
      %p239 = scmp.eq.s32.totalorder %s238, 0
      %s241 = sadd.s32 %s240, 1
      %s242 = scalar_select %p239, %s240, %s241
      %p245 = pneg %p239
      %p246 = scmp.eq.s32.totalorder %s19, 1
      %p247 = por %p245, %p246
      %p248 = scmp.ne.s32.totalorder %s240, %s243
      %p249 = scmp.eq.s32.totalorder %s19, 0
      %p250 = por %p248, %p249
      %p251 = scmp.ne.s32.totalorder %s240, %s243
      %p252 = scmp.eq.s32.totalorder %s24, 1
      %p253 = por %p251, %p252
      %p254 = scmp.ne.s32.totalorder %s243, %s244
      %p255 = scmp.eq.s32.totalorder %s24, 0
      %p256 = por %p254, %p255
      %p257 = scmp.ne.s32.totalorder %s243, %s244
      %p258 = scmp.eq.s32.totalorder %s25, 1
      %p259 = por %p257, %p258
      %p261 = scmp.ne.s32.totalorder %s244, %s260
      %p262 = scmp.eq.s32.totalorder %s25, 0
      %p263 = por %p261, %p262
      %s265 = sadd.s32 %s264, 1
      %p268 = scmp.eq.s32.totalorder %s19, 1
      %p269 = scmp.ne.s32.totalorder %s264, %s266
      %p270 = scmp.eq.s32.totalorder %s19, 0
      %p271 = por %p269, %p270
      %p272 = scmp.ne.s32.totalorder %s264, %s266
      %p273 = scmp.eq.s32.totalorder %s24, 1
      %p274 = por %p272, %p273
      %p275 = scmp.ne.s32.totalorder %s266, %s267
      %p276 = scmp.eq.s32.totalorder %s24, 0
      %p277 = por %p275, %p276
      %p278 = scmp.ne.s32.totalorder %s266, %s267
      %p279 = scmp.eq.s32.totalorder %s25, 1
      %p280 = por %p278, %p279
      %p282 = scmp.ne.s32.totalorder %s267, %s281
      %p283 = scmp.eq.s32.totalorder %s25, 0
      %p284 = por %p282, %p283
      %s285 = ssub.s32 %s26, %s45
      %s286 = ssub.s32 %s27, %s41
      %s287 = sor.u32 %s285, %s286
      %p288 = scmp.eq.s32.totalorder %s287, 0
      %s290 = sadd.s32 %s289, 1
      %s291 = scalar_select %p288, %s289, %s290
      %p294 = pneg %p288
      %p295 = scmp.eq.s32.totalorder %s19, 1
      %p296 = por %p294, %p295
      %p297 = scmp.ne.s32.totalorder %s289, %s292
      %p298 = scmp.eq.s32.totalorder %s19, 0
      %p299 = por %p297, %p298
      %p300 = scmp.ne.s32.totalorder %s289, %s292
      %p301 = scmp.eq.s32.totalorder %s24, 1
      %p302 = por %p300, %p301
      %p303 = scmp.ne.s32.totalorder %s292, %s293
      %p304 = scmp.eq.s32.totalorder %s24, 0
      %p305 = por %p303, %p304
      %p306 = scmp.ne.s32.totalorder %s292, %s293
      %p307 = scmp.eq.s32.totalorder %s25, 1
      %p308 = por %p306, %p307
      %p310 = scmp.ne.s32.totalorder %s293, %s309
      %p311 = scmp.eq.s32.totalorder %s25, 0
      %p312 = por %p310, %p311
      %p313 = scmp.le.s32.totalorder 1, %s19
      %p314 = scmp.lt.s32.totalorder %s19, 3
      %p315 = pnand %p313, %p314
      %p316 = pneg %p315
      // Predicated region
      $region9: #{block_forward.5} parent=5 // pred_check
        _
      $region10: #{block_forward.5} parent=5 // pred_check_branch
        %318 = sbr.rel (%p315) target = $region12
      $region11: #{block_forward.5} parent=5 // pred_region
        %s319 = ssub.s32 %s19, 1
        // Predicated region
        $region13: #{block_forward.5} parent=11 // pred_check
          %p320 = pneg %p115
        $region14: #{block_forward.5} parent=11 // pred_check_branch
          %322 = sbr.rel (%p320) target = $region16
        $region15: #{block_forward.5} parent=11 // pred_region
          _
        $region16: #{block_forward.5} parent=11 // pred_fallthru
          _
        // Predicated region
        $region17: #{block_forward.5} parent=11 // pred_check
          %p323 = pneg %p136
        $region18: #{block_forward.5} parent=11 // pred_check_branch
          %325 = sbr.rel (%p323) target = $region20
        $region19: #{block_forward.5} parent=11 // pred_region
          _
        $region20: #{block_forward.5} parent=11 // pred_fallthru
          _
        // Predicated region
        $region21: #{block_forward.5} parent=11 // pred_check
          %p326 = pneg %p157
        $region22: #{block_forward.5} parent=11 // pred_check_branch
          %328 = sbr.rel (%p326) target = $region24
        $region23: #{block_forward.5} parent=11 // pred_region
          _
        $region24: #{block_forward.5} parent=11 // pred_fallthru
          _
        // Predicated region
        $region25: #{block_forward.5} parent=11 // pred_check
          %p329 = pneg %p178
        $region26: #{block_forward.5} parent=11 // pred_check_branch
          %331 = sbr.rel (%p329) target = $region28
        $region27: #{block_forward.5} parent=11 // pred_region
          _
        $region28: #{block_forward.5} parent=11 // pred_fallthru
          _
        // Predicated region
        $region29: #{block_forward.5} parent=11 // pred_check
          %p332 = pneg %p204
        $region30: #{block_forward.5} parent=11 // pred_check_branch
          %334 = sbr.rel (%p332) target = $region32
        $region31: #{block_forward.5} parent=11 // pred_region
          %p335 = scmp.lt.s32.totalorder %s31, 0
          %s336 = scalar_select %p335, %s31, 0
          %s337 = smul.addr %s336, 4
          %s338 = scalar_lea.vmem %s6, %s337
        $region32: #{block_forward.5} parent=11 // pred_fallthru
          _
        // Predicated region
        $region33: #{block_forward.5} parent=11 // pred_check
          %p339 = pneg %p230
        $region34: #{block_forward.5} parent=11 // pred_check_branch
          %341 = sbr.rel (%p339) target = $region36
        $region35: #{block_forward.5} parent=11 // pred_region
          %p342 = scmp.lt.s32.totalorder %s31, 0
          %s343 = scalar_select %p342, %s31, 0
          %s344 = scalar_lea.vmem %s7, %s343
        $region36: #{block_forward.5} parent=11 // pred_fallthru
          _
        // Predicated region
        $region37: #{block_forward.5} parent=11 // pred_check
          %p345 = pneg %p256
        $region38: #{block_forward.5} parent=11 // pred_check_branch
          %347 = sbr.rel (%p345) target = $region40
        $region39: #{block_forward.5} parent=11 // pred_region
          %s348 = smul.u32 8, %s31
          %p349 = scmp.lt.s32.totalorder %s348, 7
          %s350 = scalar_select %p349, %s348, 7
          %s351 = smul.addr %s350, 4
          %s352 = scalar_lea.vmem %s8, %s351
          %s353 = smul.u32 8, %s31
        $region40: #{block_forward.5} parent=11 // pred_fallthru
          _
        // Predicated region
        $region41: #{block_forward.5} parent=11 // pred_check
          %p354 = pneg %p277
        $region42: #{block_forward.5} parent=11 // pred_check_branch
          %356 = sbr.rel (%p354) target = $region44
        $region43: #{block_forward.5} parent=11 // pred_region
          _
        $region44: #{block_forward.5} parent=11 // pred_fallthru
          _
      $region12: #{block_forward.5} parent=5 // pred_fallthru
        _
      %p357 = scmp.lt.s32.totalorder %s19, 2
      // Predicated region
      $region45: #{block_forward.5} parent=5 // pred_check
        %p358 = pneg %p357
      $region46: #{block_forward.5} parent=5 // pred_check_branch
        %360 = sbr.rel (%p358) target = $region48
      $region47: #{block_forward.5} parent=5 // pred_region
        // Predicated region
        $region49: #{block_forward.5} parent=47 // pred_check
          %p361 = pneg %p60
        $region50: #{block_forward.5} parent=47 // pred_check_branch
          %363 = sbr.rel (%p361) target = $region52
        $region51: #{block_forward.5} parent=47 // pred_region
          %p364 = scmp.lt.s32.totalorder %s26, 1
          %s365 = scalar_select %p364, %s26, 1
          %p366 = scmp.lt.s32.totalorder %s27, 0
          %s367 = scalar_select %p366, %s27, 0
          %s368 = sadd.s32 %s367, %s365
          %s369 = smul.addr %s368, 8
          %s370 = scalar_lea.vmem %s0, %s369
        $region52: #{block_forward.5} parent=47 // pred_fallthru
          _
        // Predicated region
        $region53: #{block_forward.5} parent=47 // pred_check
          %p371 = pneg %p88
        $region54: #{block_forward.5} parent=47 // pred_check_branch
          %373 = sbr.rel (%p371) target = $region56
        $region55: #{block_forward.5} parent=47 // pred_region
          %p374 = scmp.lt.s32.totalorder %s26, 1
          %s375 = scalar_select %p374, %s26, 1
          %p376 = scmp.lt.s32.totalorder %s27, 0
          %s377 = scalar_select %p376, %s27, 0
          %s378 = sadd.s32 %s377, %s375
          %s379 = smul.addr %s378, 4
          %s380 = scalar_lea.vmem %s1, %s379
        $region56: #{block_forward.5} parent=47 // pred_fallthru
          _
      $region48: #{block_forward.5} parent=5 // pred_fallthru
        _
      %p381 = scmp.le.s32.totalorder 1, %s19
      %p382 = scmp.lt.s32.totalorder %s19, 3
      %p383 = pnand %p381, %p382
      %p384 = pneg %p383
      // Predicated region
      $region57: #{block_forward.5} parent=5 // pred_check
        _
      $region58: #{block_forward.5} parent=5 // pred_check_branch
        %386 = sbr.rel (%p383) target = $region60
      $region59: #{block_forward.5} parent=5 // pred_region
        %s387 = ssub.s32 %s19, 1
        %p388 = scmp.lt.s32.totalorder %s29, 1
        %s389 = scalar_select %p388, %s29, 1
        %p390 = scmp.lt.s32.totalorder %s30, 0
        %s391 = scalar_select %p390, %s30, 0
        %s392 = sadd.s32 %s391, %s389
        %s393 = smul.addr %s392, 8
        %s394 = scalar_lea.vmem %s0, %s393
        %p395 = pneg %p66
        %p396 = pneg %p63
        %p397 = scmp.lt.s32.totalorder %s29, 1
        %s398 = scalar_select %p397, %s29, 1
        %p399 = scmp.lt.s32.totalorder %s30, 0
        %s400 = scalar_select %p399, %s30, 0
        %s401 = sadd.s32 %s400, %s398
        %s402 = smul.addr %s401, 4
        %s403 = scalar_lea.vmem %s1, %s402
        %p404 = pneg %p94
        %p405 = pneg %p91
        %p406 = pneg %p115
        %p407 = pneg %p112
        %p408 = pneg %p136
        %p409 = pneg %p133
        %p410 = pneg %p157
        %p411 = pneg %p154
        %p412 = pneg %p178
        %p413 = pneg %p175
        %p414 = scmp.lt.s32.totalorder %s31, 0
        %s415 = scalar_select %p414, %s31, 0
        %s416 = smul.addr %s415, 4
        %s417 = scalar_lea.vmem %s6, %s416
        %p418 = pneg %p204
        %p419 = pneg %p201
        %p420 = scmp.lt.s32.totalorder %s31, 0
        %s421 = scalar_select %p420, %s31, 0
        %s422 = scalar_lea.vmem %s7, %s421
        %p423 = pneg %p230
        %p424 = pneg %p227
        %s425 = smul.u32 8, %s31
        %p426 = scmp.lt.s32.totalorder %s425, 7
        %s427 = scalar_select %p426, %s425, 7
        %s428 = smul.addr %s427, 4
        %s429 = scalar_lea.vmem %s8, %s428
        %p430 = pneg %p256
        %p431 = pneg %p253
        %p432 = pneg %p277
        %p433 = pneg %p274
        %p434 = pneg %p305
        %p435 = pneg %p302
        %s436 = sand.u32 %s292, 1
        %s437 = scalar_lea.sflag [#allocation6], %s436
        %s438 = sand.u32 %s292, 1
        %s439 = smul.addr %s438, 8
        %s440 = scalar_lea.vmem [#allocation5], %s439
        %p441 = scmp.lt.s32.totalorder %s29, 1
        %s442 = scalar_select %p441, %s29, 1
        %p443 = scmp.lt.s32.totalorder %s30, 0
        %s444 = scalar_select %p443, %s30, 0
        %s445 = sadd.s32 %s444, %s442
        %s446 = smul.addr %s445, 8
        %s447 = scalar_lea.vmem %s0, %s446
        %p448 = scmp.lt.s32.totalorder %s29, 1
        %s449 = scalar_select %p448, %s29, 1
        %p450 = scmp.lt.s32.totalorder %s30, 0
        %s451 = scalar_select %p450, %s30, 0
        %s452 = sadd.s32 %s451, %s449
        %s453 = smul.addr %s452, 4
        %s454 = scalar_lea.vmem %s1, %s453
        %p455 = scmp.lt.s32.totalorder %s31, 0
        %s456 = scalar_select %p455, %s31, 0
        %s457 = smul.addr %s456, 4
        %s458 = scalar_lea.vmem %s6, %s457
        %p459 = scmp.lt.s32.totalorder %s31, 0
        %s460 = scalar_select %p459, %s31, 0
        %s461 = scalar_lea.vmem %s7, %s460
        %s462 = smul.u32 8, %s31
        %p463 = scmp.lt.s32.totalorder %s462, 7
        %s464 = scalar_select %p463, %s462, 7
        %s465 = smul.addr %s464, 4
        %s466 = scalar_lea.vmem %s8, %s465
        %s467 = smul.u32 8, %s31
        %p469 = scmp.eq.s32.totalorder %s31, 0
        // Predicated region
        $region61: #{block_forward.5} parent=59 // pred_check
          %p470 = pneg %p469
        $region62: #{block_forward.5} parent=59 // pred_check_branch
          %472 = sbr.rel (%p470) target = $region64
        $region63: #{block_forward.5} parent=59 // pred_region
          %v473 = vld [vmem:[%s447] sm:$0xff]
          %v474 = vld [vmem:[%s454] sm:$0xf]
          %v475 = vld [vmem:[%s2] sm:$0xf]
          %v476 = vld [vmem:[%s2 + $0x4] sm:$0xf]
          %v477 = vld [vmem:[%s2 + $0x8] sm:$0xf]
          %v478 = vld [vmem:[%s2 + $0xc] sm:$0xf]
          %v479 = vld [vmem:[%s3] sm:$0x1]
          %v481 = vlaneseq
          %v482 = vshrl.u32 %v481, 7
          %v483 = vsub.s32 0, %v482
          %v484 = vrot.slane %v479, %v483
          %v490 = vunpack.c.l.b16 %v475
          %v491 = vunpack.c.l.b16 %v476
          %v492 = vunpack.c.l.b16 %v477
          %v493 = vunpack.c.l.b16 %v478
          %v494 = vpack.c.b16 %v491, %v490
          %v495 = vpack.c.b16 %v493, %v492
          %vm498 = vcmask 261120
          %v500 = vsel %vm498, %v474, 0
          %502 = vmatprep.subr.bf16.mxu0 0
          %503 = vmatpush1.bf16.msra.mxu0 0
          %504 = vmatprep.subr.bf16.mxu0 0
          %505 = vmatpush1.bf16.msra.mxu0 0
          %506 = vmatprep.subr.bf16.mxu0 0
          %507 = vmatpush1.bf16.msra.mxu0 0
          %508 = vmatprep.subr.bf16.mxu0 0
          %509 = vmatpush1.bf16.msra.mxu0 0
          %510 = vmatprep.subr.bf16.mxu0 0
          %511 = vmatpush1.bf16.msra.mxu0 0
          %512 = vmatprep.subr.bf16.mxu0 0
          %513 = vmatpush1.bf16.msra.mxu0 0
          %514 = vmatprep.subr.bf16.mxu0 0
          %515 = vmatpush1.bf16.msra.mxu0 %v495
          %516 = vmatprep.subr.bf16.mxu0 0
          %517 = vmatpush1.bf16.msra.mxu0 %v494
          %518 = vmatprep.subr.bf16.mxu0 0
          %519 = vmatpush2.bf16.msra.mxu0 0
          %520 = vmatprep.subr.bf16.mxu0 0
          %521 = vmatpush2.bf16.msra.mxu0 0
          %522 = vmatprep.subr.bf16.mxu0 0
          %523 = vmatpush2.bf16.msra.mxu0 0
          %524 = vmatprep.subr.bf16.mxu0 0
          %525 = vmatpush2.bf16.msra.mxu0 0
          %526 = vmatprep.subr.bf16.mxu0 0
          %527 = vmatpush2.bf16.msra.mxu0 0
          %528 = vmatprep.subr.bf16.mxu0 0
          %529 = vmatpush2.bf16.msra.mxu0 0
          %530 = vmatprep.subr.bf16.mxu0 0
          %531 = vmatpush2.bf16.msra.mxu0 0
          %532 = vmatprep.subr.bf16.mxu0 0
          %533 = vmatpush2.bf16.msra.mxu0 0
          %534 = vmatprep.mubr.bf16.mxu0 0
          %535 = vmatmul.mubr.bf16.gmra.mxu0 %v500
          %v536 = vpop.f32.mrf.mxu0
          %v537 = vadd.f32 %v484, %v536
          %v538 = vpop.f32.mrf.mxu0
          %v539 = vpop.f32.mrf.mxu0
          %v540 = vpop.f32.mrf.mxu0
          %541 = vdwg.mxu0
          %v542 = vadd.f32 %v473, %v537
          %543 = vst.msk [vmem:[#allocation2] sm:$0xff] %vm498, %v542
          %v544 = vld [vmem:[%s4] sm:$0x1]
          %v545 = vld [vmem:[%s5] sm:$0x1]
          %v546 = vsel %vm498, %v542, 0.0
          %547 = vadd.xlane.f32.xlu0 %v546
          %v548 = vpop.xlane.xlu0 %547
          %v549 = vrcp.pop 32.0
          %v550 = vmul.f32 %v548, %v549
          %v551 = vsub.f32 %v542, %v550
          %v552 = vmul.f32 %v551, %v551
          %v553 = vsel %vm498, %v552, 0.0
          %554 = vadd.xlane.f32.xlu0 %v553
          %v555 = vpop.xlane.xlu0 %554
          %v556 = vmul.f32 %v555, 0.032258064
          %v557 = vrsqrt.pop %v556
          %v558 = vmul.f32 %v556, %v557
          %vm559 = vcmp.eq.f32.partialorder %v556, inf
          %v560 = vsel %vm559, %v556, %v558
          %vm561 = vcmp.eq.f32.partialorder %v556, 0.0
          %v562 = vand.u32 %v556, 2147483648
          %v563 = vsel %vm561, %v562, %v560
          %v565 = vlaneseq
          %v566 = vshrl.u32 %v565, 7
          %v567 = vsub.s32 0, %v566
          %v568 = vrot.slane %v544, %v567
          %v570 = vmul.f32 %v568, %v551
          %v571 = vadd.f32 %v563, 1e-06
          %v572 = vrcp.pop %v571
          %v573 = vmul.f32 %v570, %v572
          %v575 = vlaneseq
          %v576 = vshrl.u32 %v575, 7
          %v577 = vsub.s32 0, %v576
          %v578 = vrot.slane %v545, %v577
          %v580 = vadd.f32 %v573, %v578
          %v581 = vpack.c.bf16 %v580, %v580
          %vm582 = vcmask 257024
          %583 = vst.msk [vmem:[#allocation3] sm:$0xf] %vm582, %v581
          %584 = vst.msk [vmem:[#allocation4] sm:$0xff] %vm498, 0.0
        $region64: #{block_forward.5} parent=59 // pred_fallthru
          _
        %v585 = vld [vmem:[#allocation3] sm:$0xf]
        %v586 = vld [vmem:[%s458] sm:$0xf]
        %v587 = vld [vmem:[%s458 + $0x4] sm:$0xf]
        %v588 = vld [vmem:[%s458 + $0x8] sm:$0xf]
        %v589 = vld [vmem:[%s458 + $0xc] sm:$0xf]
        %v590 = vld [vmem:[%s461] sm:$0x1]
        %v592 = vlaneseq
        %v593 = vshrl.u32 %v592, 7
        %v594 = vsub.s32 0, %v593
        %v595 = vrot.slane %v590, %v594
        %v601 = vunpack.c.l.b16 %v586
        %v602 = vunpack.c.l.b16 %v587
        %v603 = vunpack.c.l.b16 %v588
        %v604 = vunpack.c.l.b16 %v589
        %v605 = vpack.c.b16 %v602, %v601
        %v606 = vpack.c.b16 %v604, %v603
        %vm609 = vcmask 261120
        %v611 = vsel %vm609, %v585, 0
        %613 = vmatprep.subr.bf16.mxu0 0
        %614 = vmatpush1.bf16.msra.mxu0 0
        %615 = vmatprep.subr.bf16.mxu0 0
        %616 = vmatpush1.bf16.msra.mxu0 0
        %617 = vmatprep.subr.bf16.mxu0 0
        %618 = vmatpush1.bf16.msra.mxu0 0
        %619 = vmatprep.subr.bf16.mxu0 0
        %620 = vmatpush1.bf16.msra.mxu0 0
        %621 = vmatprep.subr.bf16.mxu0 0
        %622 = vmatpush1.bf16.msra.mxu0 0
        %623 = vmatprep.subr.bf16.mxu0 0
        %624 = vmatpush1.bf16.msra.mxu0 0
        %625 = vmatprep.subr.bf16.mxu0 0
        %626 = vmatpush1.bf16.msra.mxu0 %v606
        %627 = vmatprep.subr.bf16.mxu0 0
        %628 = vmatpush1.bf16.msra.mxu0 %v605
        %629 = vmatprep.subr.bf16.mxu0 0
        %630 = vmatpush2.bf16.msra.mxu0 0
        %631 = vmatprep.subr.bf16.mxu0 0
        %632 = vmatpush2.bf16.msra.mxu0 0
        %633 = vmatprep.subr.bf16.mxu0 0
        %634 = vmatpush2.bf16.msra.mxu0 0
        %635 = vmatprep.subr.bf16.mxu0 0
        %636 = vmatpush2.bf16.msra.mxu0 0
        %637 = vmatprep.subr.bf16.mxu0 0
        %638 = vmatpush2.bf16.msra.mxu0 0
        %639 = vmatprep.subr.bf16.mxu0 0
        %640 = vmatpush2.bf16.msra.mxu0 0
        %641 = vmatprep.subr.bf16.mxu0 0
        %642 = vmatpush2.bf16.msra.mxu0 0
        %643 = vmatprep.subr.bf16.mxu0 0
        %644 = vmatpush2.bf16.msra.mxu0 0
        %645 = vmatprep.mubr.bf16.mxu0 0
        %646 = vmatmul.mubr.bf16.gmra.mxu0 %v611
        %v647 = vpop.f32.mrf.mxu0
        %v648 = vadd.f32 %v595, %v647
        %v649 = vpop.f32.mrf.mxu0
        %v650 = vpop.f32.mrf.mxu0
        %v651 = vpop.f32.mrf.mxu0
        %652 = vdwg.mxu0
        %v653 = vmul.f32 %v648, 0.5
        %v654 = vmul.f32 %v648, %v648
        %v655 = vmul.f32 %v648, %v654
        %v656 = vmul.f32 %v655, 0.044715
        %v657 = vadd.f32 %v648, %v656
        %v658 = vmul.f32 %v657, 0.7978846
        %v659 = vtanh.pop %v658
        %v660 = vadd.f32 %v659, 1.0
        %v661 = vmul.f32 %v653, %v660
        %v662 = vld [vmem:[#allocation4] sm:$0xff]
        %v663 = vpack.c.bf16 %v661, %v661
        %v664 = vld [vmem:[%s466] sm:$0xf]
        %v665 = vld [vmem:[%s466 + $0x4] sm:$0xf]
        %v666 = vld [vmem:[%s466 + $0x8] sm:$0xf]
        %v667 = vld [vmem:[%s466 + $0xc] sm:$0xf]
        %v668 = vld [vmem:[%s466 + $0x10] sm:$0xf]
        %v669 = vld [vmem:[%s466 + $0x14] sm:$0xf]
        %v670 = vld [vmem:[%s466 + $0x18] sm:$0xf]
        %v671 = vld [vmem:[%s466 + $0x1c] sm:$0xf]
        %v680 = vunpack.c.l.b16 %v664
        %v681 = vunpack.c.l.b16 %v665
        %v682 = vunpack.c.l.b16 %v666
        %v683 = vunpack.c.l.b16 %v667
        %v684 = vunpack.c.l.b16 %v668
        %v685 = vunpack.c.l.b16 %v669
        %v686 = vunpack.c.l.b16 %v670
        %v687 = vunpack.c.l.b16 %v671
        %v688 = vpack.c.b16 %v681, %v680
        %v689 = vpack.c.b16 %v683, %v682
        %v690 = vpack.c.b16 %v685, %v684
        %v691 = vpack.c.b16 %v687, %v686
        %vm696 = vcmask 523264
        %v698 = vsel %vm696, %v663, 0
        %700 = vmatprep.subr.bf16.mxu0 0
        %701 = vmatpush1.bf16.msra.mxu0 0
        %702 = vmatprep.subr.bf16.mxu0 0
        %703 = vmatpush1.bf16.msra.mxu0 0
        %704 = vmatprep.subr.bf16.mxu0 0
        %705 = vmatpush1.bf16.msra.mxu0 0
        %706 = vmatprep.subr.bf16.mxu0 0
        %707 = vmatpush1.bf16.msra.mxu0 0
        %708 = vmatprep.subr.bf16.mxu0 0
        %709 = vmatpush1.bf16.msra.mxu0 %v691
        %710 = vmatprep.subr.bf16.mxu0 0
        %711 = vmatpush1.bf16.msra.mxu0 %v690
        %712 = vmatprep.subr.bf16.mxu0 0
        %713 = vmatpush1.bf16.msra.mxu0 %v689
        %714 = vmatprep.subr.bf16.mxu0 0
        %715 = vmatpush1.bf16.msra.mxu0 %v688
        %716 = vmatprep.subr.bf16.mxu0 0
        %717 = vmatpush2.bf16.msra.mxu0 0
        %718 = vmatprep.subr.bf16.mxu0 0
        %719 = vmatpush2.bf16.msra.mxu0 0
        %720 = vmatprep.subr.bf16.mxu0 0
        %721 = vmatpush2.bf16.msra.mxu0 0
        %722 = vmatprep.subr.bf16.mxu0 0
        %723 = vmatpush2.bf16.msra.mxu0 0
        %724 = vmatprep.subr.bf16.mxu0 0
        %725 = vmatpush2.bf16.msra.mxu0 0
        %726 = vmatprep.subr.bf16.mxu0 0
        %727 = vmatpush2.bf16.msra.mxu0 0
        %728 = vmatprep.subr.bf16.mxu0 0
        %729 = vmatpush2.bf16.msra.mxu0 0
        %730 = vmatprep.subr.bf16.mxu0 0
        %731 = vmatpush2.bf16.msra.mxu0 0
        %732 = vmatprep.mubr.bf16.mxu0 0
        %733 = vmatmul.mubr.bf16.gmra.mxu0 %v698
        %v734 = vpop.f32.mrf.mxu0
        %v735 = vadd.f32 0.0, %v734
        %v736 = vpop.f32.mrf.mxu0
        %v737 = vpop.f32.mrf.mxu0
        %v738 = vpop.f32.mrf.mxu0
        %739 = vdwg.mxu0
        %v740 = vadd.f32 %v662, %v735
        %741 = vst.msk [vmem:[#allocation4] sm:$0xff] %vm609, %v740
        // Predicated region
        $region65: #{block_forward.5} parent=59 // pred_check
          %p742 = pneg %p469
        $region66: #{block_forward.5} parent=59 // pred_check_branch
          %744 = sbr.rel (%p742) target = $region68
        $region67: #{block_forward.5} parent=59 // pred_region
          %v745 = vld [vmem:[#allocation2] sm:$0xff]
          %v746 = vld [vmem:[#allocation4] sm:$0xff]
          %v747 = vadd.f32 %v745, %v746
          %v748 = vld [vmem:[%s9] sm:$0x1]
          %v750 = vlaneseq
          %v751 = vshrl.u32 %v750, 7
          %v752 = vsub.s32 0, %v751
          %v753 = vrot.slane %v748, %v752
          %v755 = vadd.f32 %v747, %v753
          %756 = vst.msk [vmem:[%s440] sm:$0xff] %vm609, %v755
        $region68: #{block_forward.5} parent=59 // pred_fallthru
          _
        %s757 = sand.u32 %s292, 1
        %s758 = scalar_lea.sflag [#allocation6], %s757
        %s759 = sand.u32 %s292, 1
        %s760 = smul.addr %s759, 8
        %s761 = scalar_lea.vmem [#allocation5], %s760
        // Predicated region
        $region69: #{block_forward.5} parent=59 // pred_check
          %p762 = pneg %p302
        $region70: #{block_forward.5} parent=59 // pred_check_branch
          %764 = sbr.rel (%p762) target = $region72
        $region71: #{block_forward.5} parent=59 // pred_region
          %s766 = ssub.s32 128, 128
          %767 = vsyncadd %s758, %s766
          %s768 = sadd.s32 %s30, %s29
          %s769 = smul.addr %s768, 128
          %s770 = scalar_lea.hbm %s10, %s769
          %s772 = sshll.u32 %s761, 4
          %s773 = int_to_ptr.vmem [resolvable:$true] %s772
          %775 = dma.vmem_to_hbm [thread:$0]  %s773, 128, %s770, %s758
        $region72: #{block_forward.5} parent=59 // pred_fallthru
          _
      $region60: #{block_forward.5} parent=5 // pred_fallthru
        _
      %p776 = scmp.le.s32.totalorder 2, %s19
      // Predicated region
      $region73: #{block_forward.5} parent=5 // pred_check
        %p777 = pneg %p776
      $region74: #{block_forward.5} parent=5 // pred_check_branch
        %779 = sbr.rel (%p777) target = $region76
      $region75: #{block_forward.5} parent=5 // pred_region
        %s780 = ssub.s32 %s19, 2
        // Predicated region
        $region77: #{block_forward.5} parent=75 // pred_check
          %p781 = pneg %p308
        $region78: #{block_forward.5} parent=75 // pred_check_branch
          %783 = sbr.rel (%p781) target = $region80
        $region79: #{block_forward.5} parent=75 // pred_region
          %s784 = sand.u32 %s293, 1
          %s785 = scalar_lea.sflag [#allocation6], %s784
          %s786 = sand.u32 %s293, 1
          %s787 = smul.addr %s786, 8
          %s788 = scalar_lea.vmem [#allocation5], %s787
          %789 = dma.done %s785, 128
        $region80: #{block_forward.5} parent=75 // pred_fallthru
          _
      $region76: #{block_forward.5} parent=5 // pred_fallthru
        _
    $region6: #{block_forward.5} parent=1 // loop_footer
      %s23 = sadd.s32 1, %s19
    $region7: #{block_forward.5} parent=1 // loop_footer_branch
      %18 = sbr.rel target = $region3
    $region8: #{block_forward.5} parent=1 // loop_exit
      _
    %790 = vsyncpa [#allocation6], 1
    %s791 = scalar_lea.sflag [#allocation6], 1
    %792 = vsyncpa %s791, 1

</llo_original>
